<compile_context>
chip_gen: v7x
topology: tpu7x:2x2x1
jax: 0.10.0
libtpu: 0.0.40
codegen_flags: <defaults>
</compile_context>

<pallas_src>
import jax
import jax.numpy as jnp
from jax.experimental import pallas as pl
from jax.experimental.pallas import tpu as pltpu


# ---------------------------------------------------------------------------
# small helpers (run inside the kernel on values)
# ---------------------------------------------------------------------------
def _leaky(v):
    # LeakyReLU(0.2)
    return jnp.where(v >= 0, v, 0.2 * v)


def _bn_pair(E, O, gamma, beta):
    # Training-mode BatchNorm1d over all batch*length positions, where the positions are
    # stored as two halves E (even) and O (odd), each (N*L, C). Biased variance, eps=1e-5,
    # centered two-pass variance (avoids E[x^2]-E[x]^2 cancellation).
    cnt = jnp.float32(2 * E.shape[0])
    m = (jnp.sum(E, axis=0, keepdims=True) + jnp.sum(O, axis=0, keepdims=True)) / cnt
    dE = E - m
    dO = O - m
    var = (jnp.sum(dE * dE, axis=0, keepdims=True)
           + jnp.sum(dO * dO, axis=0, keepdims=True)) / cnt
    s = jax.lax.rsqrt(var + 1e-5) * gamma
    return dE * s + beta, dO * s + beta


def _conv3_split(E, O, w_packed, b_packed, pad_e, pad_o, N, L, C):
    # Conv1d(k=3, pad=1) over the interleaved sequence h[2p]=E[p], h[2p+1]=O[p]:
    #   even[p] = O[p-1] W0 + E[p] W1 + O[p] W2
    #   odd[p]  = E[p]   W0 + O[p] W1 + E[p+1] W2
    # expressed as ONE K-packed matmul (N*L, 4C) @ (4C, 2C) -> [even | odd].
    # pad_e / pad_o edge rows (0 and L+1) hold zeros (conv zero padding).
    E3 = E.reshape(N, L, C)
    O3 = O.reshape(N, L, C)
    pad_o[:, 1:L + 1, :] = O3
    pad_e[:, 1:L + 1, :] = E3
    o_prev = pad_o[:, 0:L, :]        # O[p-1]
    e_next = pad_e[:, 2:L + 2, :]    # E[p+1]
    lhs = jnp.concatenate([o_prev, E3, O3, e_next], axis=-1).reshape(N * L, 4 * C)
    out = jnp.dot(lhs.astype(jnp.bfloat16), w_packed,
                  preferred_element_type=jnp.float32) + b_packed        # (N*L, 2C)
    return out[:, :C], out[:, C:]


def _core(x_ref, wt_ref, bt_ref, g0_ref, b0_ref, g1_ref, b1_ref,
          wa_ref, ba_ref, g2_ref, b2_ref, wb_ref, bb_ref,
          pad_x, pad_e, pad_o, Co):
    """first (ConvT k4 s2 p1 + LeakyReLU + BN) -> res_block -> residual add.

    Returns the residual output in even/odd split form: (z_even, z_odd), each (N*L, Co)."""
    N, L, Ci = x_ref.shape
    NL = N * L

    # zero only the padding edge rows once; interiors are always fully overwritten
    pad_x[:, 0:1, :] = jnp.zeros((N, 1, Ci), jnp.float32)
    pad_x[:, L + 1:L + 2, :] = jnp.zeros((N, 1, Ci), jnp.float32)
    pad_e[:, 0:1, :] = jnp.zeros((N, 1, Co), jnp.float32)
    pad_e[:, L + 1:L + 2, :] = jnp.zeros((N, 1, Co), jnp.float32)
    pad_o[:, 0:1, :] = jnp.zeros((N, 1, Co), jnp.float32)
    pad_o[:, L + 1:L + 2, :] = jnp.zeros((N, 1, Co), jnp.float32)

    # --- first: ConvTranspose1d(k=4, s=2, p=1) as ONE K-packed matmul ---
    x = x_ref[...]
    pad_x[:, 1:L + 1, :] = x
    xp = pad_x[:, 0:L, :]          # x[m-1]
    xn = pad_x[:, 2:L + 2, :]      # x[m+1]
    lhs0 = jnp.concatenate([xp, x, xn], axis=-1).reshape(NL, 3 * Ci)
    y = jnp.dot(lhs0.astype(jnp.bfloat16), wt_ref[...],
                preferred_element_type=jnp.float32) + bt_ref[...]       # (NL, 2Co)=[even|odd]
    y = _leaky(y)
    E0, O0 = _bn_pair(y[:, :Co], y[:, Co:], g0_ref[...], b0_ref[...])   # `first` output

    # --- res_block: BN -> lrelu -> conv3 -> BN -> lrelu -> conv3 ---
    E, O = _bn_pair(E0, O0, g1_ref[...], b1_ref[...])
    E = _leaky(E)
    O = _leaky(O)
    c1e, c1o = _conv3_split(E, O, wa_ref[...], ba_ref[...], pad_e, pad_o, N, L, Co)

    E, O = _bn_pair(c1e, c1o, g2_ref[...], b2_ref[...])
    E = _leaky(E)
    O = _leaky(O)
    c2e, c2o = _conv3_split(E, O, wb_ref[...], bb_ref[...], pad_e, pad_o, N, L, Co)

    # residual add with the `first` output
    return c2e + E0, c2o + O0


# ---------------------------------------------------------------------------
# fused kernels
# ---------------------------------------------------------------------------
def gbr_attn_kernel(tg_ref, x_ref, wt_ref, bt_ref, g0_ref, b0_ref, g1_ref, b1_ref,
                    wa_ref, ba_ref, g2_ref, b2_ref, wb_ref, bb_ref,
                    wq_ref, bq_ref, wk_ref, bk_ref, wv_ref, bv_ref,
                    o_ref, pad_x, pad_e, pad_o, zcat):
    N, L, Co2 = o_ref.shape
    Co = Co2 // 2
    L2 = 2 * L

    ze, zo = _core(x_ref, wt_ref, bt_ref, g0_ref, b0_ref, g1_ref, b1_ref,
                   wa_ref, ba_ref, g2_ref, b2_ref, wb_ref, bb_ref,
                   pad_x, pad_e, pad_o, Co)                      # (N*L, Co) each

    # SelfAttention over the full length-2L sequence, computed with positions in block order
    # [all even ; all odd]: softmax attention is equivariant to a consistent position
    # permutation, so only the final write-out ordering matters (handled below).
    zcat[:, 0:L, :] = ze.reshape(N, L, Co)
    zcat[:, L:L2, :] = zo.reshape(N, L, Co)
    z_blk = zcat[...]                                            # (N, 2L, Co), block order
    zb = z_blk.reshape(N * L2, Co).astype(jnp.bfloat16)

    q = jnp.dot(zb, wq_ref[...], preferred_element_type=jnp.float32) + bq_ref[...]
    k = jnp.dot(zb, wk_ref[...], preferred_element_type=jnp.float32) + bk_ref[...]
    v = jnp.dot(zb, wv_ref[...], preferred_element_type=jnp.float32) + bv_ref[...]
    c8 = q.shape[-1]
    qb = q.reshape(N, L2, c8).astype(jnp.bfloat16)
    kb = k.reshape(N, L2, c8).astype(jnp.bfloat16)
    vb = v.reshape(N, L2, Co).astype(jnp.bfloat16)

    energy = jnp.einsum('bqc,bkc->bqk', qb, kb,
                        preferred_element_type=jnp.float32)      # (N, 2L, 2L)
    mx = jnp.max(energy, axis=-1, keepdims=True)
    e = jnp.exp(energy - mx)
    attn = e * pl.reciprocal(jnp.sum(e, axis=-1, keepdims=True), approx=True)
    ctx = jnp.einsum('bqk,bkc->bqc', attn.astype(jnp.bfloat16), vb,
                     preferred_element_type=jnp.float32)         # (N, 2L, Co), block order

    out_blk = tg_ref[0] * ctx + z_blk                            # tanh(gamma)*attn + x

    # lane-pack [even | odd]; the wrapper reshape (N, L, 2Co) -> (N, 2L, Co) interleaves for free
    o_ref[:, :, 0:Co] = out_blk[:, 0:L, :]
    o_ref[:, :, Co:Co2] = out_blk[:, L:L2, :]


def gbr_noattn_kernel(x_ref, wt_ref, bt_ref, g0_ref, b0_ref, g1_ref, b1_ref,
                      wa_ref, ba_ref, g2_ref, b2_ref, wb_ref, bb_ref,
                      o_ref, pad_x, pad_e, pad_o):
    N, L, Co2 = o_ref.shape
    Co = Co2 // 2
    ze, zo = _core(x_ref, wt_ref, bt_ref, g0_ref, b0_ref, g1_ref, b1_ref,
                   wa_ref, ba_ref, g2_ref, b2_ref, wb_ref, bb_ref,
                   pad_x, pad_e, pad_o, Co)
    o_ref[:, :, 0:Co] = ze.reshape(N, L, Co)
    o_ref[:, :, Co:Co2] = zo.reshape(N, L, Co)


# ---------------------------------------------------------------------------
# weight packing (wrapper-side, one-time)
# ---------------------------------------------------------------------------
def _pack_first_weight(wt):
    # wt: (4, Ci, Co) per-tap ConvTranspose1d(k=4, s=2, p=1) weights (tap k -> (Ci, Co)).
    # LHS = [x[m-1] | x[m] | x[m+1]]; output = [even | odd]:
    #   even[m] = x[m] W1 + x[m-1] W3 ;  odd[m] = x[m+1] W0 + x[m] W2
    Ci, Co = wt.shape[1], wt.shape[2]
    z = jnp.zeros((Ci, Co), wt.dtype)
    rows = [jnp.concatenate([wt[3], z], axis=1),
            jnp.concatenate([wt[1], wt[2]], axis=1),
            jnp.concatenate([z, wt[0]], axis=1)]
    return jnp.concatenate(rows, axis=0)                         # (3Ci, 2Co)


def _pack_k3_weight(w):
    # w: (3, C, C) per-tap Conv1d(k=3, p=1) weights; split-domain LHS = [O[p-1]|E|O|E[p+1]].
    C = w.shape[1]
    z = jnp.zeros((C, C), w.dtype)
    rows = [jnp.concatenate([w[0], z], axis=1),
            jnp.concatenate([w[1], w[0]], axis=1),
            jnp.concatenate([w[2], w[1]], axis=1),
            jnp.concatenate([z, w[2]], axis=1)]
    return jnp.concatenate(rows, axis=0)                         # (4C, 2C)


# ---------------------------------------------------------------------------
# Parameter init (deterministic, synthetic — shapes follow the module __init__).
# ---------------------------------------------------------------------------
def init_params(key, in_ch, out_ch, use_attn=True):
    ks = jax.random.split(key, 20)
    s = 0.2
    p = {
        "wt": s * jax.random.normal(ks[0], (4, in_ch, out_ch), jnp.float32),
        "bt": s * jax.random.normal(ks[1], (1, out_ch), jnp.float32),
        "bn0_g": 1.0 + 0.1 * jax.random.normal(ks[2], (1, out_ch), jnp.float32),
        "bn0_b": 0.1 * jax.random.normal(ks[3], (1, out_ch), jnp.float32),
        "bn1_g": 1.0 + 0.1 * jax.random.normal(ks[4], (1, out_ch), jnp.float32),
        "bn1_b": 0.1 * jax.random.normal(ks[5], (1, out_ch), jnp.float32),
        "wa": s * jax.random.normal(ks[6], (3, out_ch, out_ch), jnp.float32),
        "ba": s * jax.random.normal(ks[7], (1, out_ch), jnp.float32),
        "bn2_g": 1.0 + 0.1 * jax.random.normal(ks[8], (1, out_ch), jnp.float32),
        "bn2_b": 0.1 * jax.random.normal(ks[9], (1, out_ch), jnp.float32),
        "wb": s * jax.random.normal(ks[10], (3, out_ch, out_ch), jnp.float32),
        "bb": s * jax.random.normal(ks[11], (1, out_ch), jnp.float32),
    }
    if use_attn:
        c8 = out_ch // 8
        p.update({
            "wq": s * jax.random.normal(ks[12], (out_ch, c8), jnp.float32),
            "bq": s * jax.random.normal(ks[13], (1, c8), jnp.float32),
            "wk": s * jax.random.normal(ks[14], (out_ch, c8), jnp.float32),
            "bk": s * jax.random.normal(ks[15], (1, c8), jnp.float32),
            "wv": s * jax.random.normal(ks[16], (out_ch, out_ch), jnp.float32),
            "bv": s * jax.random.normal(ks[17], (1, out_ch), jnp.float32),
            # module inits gamma=0.0 (which would zero the attention branch);
            # use a nonzero deterministic value so the branch is exercised.
            "gamma": jnp.float32(0.5),
        })
    return p


# ---------------------------------------------------------------------------
# Forward wrapper
# ---------------------------------------------------------------------------
def generator_block_residual(x, params, use_attn=True):
    # x layout: (N, L, Cin) channels-last (PyTorch input would be (N, Cin, L)); returns (N, 2L, Co)
    N, L, Ci = x.shape
    Co = params["wt"].shape[-1]
    L2 = 2 * L

    # one-time packing + bf16 cast of the MXU operands (f32 accumulation in-kernel)
    wt_p = _pack_first_weight(params["wt"]).astype(jnp.bfloat16)
    bt_p = jnp.concatenate([params["bt"], params["bt"]], axis=-1)
    wa_p = _pack_k3_weight(params["wa"]).astype(jnp.bfloat16)
    ba_p = jnp.concatenate([params["ba"], params["ba"]], axis=-1)
    wb_p = _pack_k3_weight(params["wb"]).astype(jnp.bfloat16)
    bb_p = jnp.concatenate([params["bb"], params["bb"]], axis=-1)

    vmem = pl.BlockSpec(memory_space=pltpu.MemorySpace.VMEM)
    smem = pl.BlockSpec(memory_space=pltpu.MemorySpace.SMEM)
    # kernel emits lane-packed [even | odd] (last dim 2*Co >= 256 -> lane-dense stores);
    # the reshape at the end is a free row-major reinterpretation to (N, 2L, Co).
    out_shape = jax.ShapeDtypeStruct((N, L, 2 * Co), jnp.float32)

    common = (x, wt_p, bt_p, params["bn0_g"], params["bn0_b"],
              params["bn1_g"], params["bn1_b"], wa_p, ba_p,
              params["bn2_g"], params["bn2_b"], wb_p, bb_p)
    scratch = [pltpu.VMEM((N, L + 2, Ci), jnp.float32),
               pltpu.VMEM((N, L + 2, Co), jnp.float32),
               pltpu.VMEM((N, L + 2, Co), jnp.float32)]

    flops = (2 * (N * L) * (3 * Ci) * (2 * Co)            # transposed conv
             + 2 * 2 * (N * L) * (4 * Co) * (2 * Co))     # two k=3 convs
    transcendentals = 0
    bytes_accessed = (4 * (x.size + N * L2 * Co)
                      + 2 * (wt_p.size + wa_p.size + wb_p.size))

    if not use_attn:
        return pl.pallas_call(
            gbr_noattn_kernel,
            out_shape=out_shape,
            in_specs=[vmem] * len(common),
            out_specs=vmem,
            scratch_shapes=scratch,
            cost_estimate=pl.CostEstimate(flops=flops, transcendentals=transcendentals,
                                          bytes_accessed=bytes_accessed),
        )(*common).reshape(N, L2, Co)

    c8 = params["wq"].shape[-1]
    flops += (2 * (N * L2) * Co * (2 * c8 + Co)           # q, k, v projections
              + 2 * N * L2 * L2 * c8                      # energy
              + 2 * N * L2 * L2 * Co)                     # attn @ v
    transcendentals = N * L2 * L2
    bytes_accessed += 2 * (params["wq"].size + params["wk"].size + params["wv"].size)

    tg = jnp.tanh(params["gamma"]).reshape(1).astype(jnp.float32)
    args = (tg,) + common + (params["wq"].astype(jnp.bfloat16), params["bq"],
                             params["wk"].astype(jnp.bfloat16), params["bk"],
                             params["wv"].astype(jnp.bfloat16), params["bv"])
    out = pl.pallas_call(
        gbr_attn_kernel,
        out_shape=out_shape,
        in_specs=[smem] + [vmem] * (len(args) - 1),
        out_specs=vmem,
        scratch_shapes=scratch + [pltpu.VMEM((N, L2, Co), jnp.float32)],
        cost_estimate=pl.CostEstimate(flops=flops, transcendentals=transcendentals,
                                      bytes_accessed=bytes_accessed),
    )(*args)
    return out.reshape(N, L2, Co)


if __name__ == "__main__":
    key = jax.random.PRNGKey(0)
    # in_channels=128, out_channels=128 (lane-dense), seq len 8 -> 16
    N, Ci, Co, L = 2, 128, 128, 8
    kx, kp = jax.random.split(key)

    # PyTorch-equivalent input would be (N, Ci, L); kernel layout is channels-last (N, L, Ci).
    x = jax.random.normal(kx, (N, L, Ci), jnp.float32)
    params = init_params(kp, Ci, Co, use_attn=True)

    out = generator_block_residual(x, params, use_attn=True)
    out = jax.block_until_ready(out)

    assert out.shape == (N, 2 * L, Co), out.shape
    assert bool(jnp.all(jnp.isfinite(out)))
    print("KERNEL_OK")
</pallas_src>

<mosaic_0001>
module attributes {stable_mosaic.version = 11 : i64} {
  func.func @gbr_attn_kernel(%arg0: memref<1xf32, #tpu.memory_space<smem>>, %arg1: memref<2x8x128xf32, #tpu.memory_space<vmem>>, %arg2: memref<384x256xbf16, #tpu.memory_space<vmem>>, %arg3: memref<1x256xf32, #tpu.memory_space<vmem>>, %arg4: memref<1x128xf32, #tpu.memory_space<vmem>>, %arg5: memref<1x128xf32, #tpu.memory_space<vmem>>, %arg6: memref<1x128xf32, #tpu.memory_space<vmem>>, %arg7: memref<1x128xf32, #tpu.memory_space<vmem>>, %arg8: memref<512x256xbf16, #tpu.memory_space<vmem>>, %arg9: memref<1x256xf32, #tpu.memory_space<vmem>>, %arg10: memref<1x128xf32, #tpu.memory_space<vmem>>, %arg11: memref<1x128xf32, #tpu.memory_space<vmem>>, %arg12: memref<512x256xbf16, #tpu.memory_space<vmem>>, %arg13: memref<1x256xf32, #tpu.memory_space<vmem>>, %arg14: memref<128x16xbf16, #tpu.memory_space<vmem>>, %arg15: memref<1x16xf32, #tpu.memory_space<vmem>>, %arg16: memref<128x16xbf16, #tpu.memory_space<vmem>>, %arg17: memref<1x16xf32, #tpu.memory_space<vmem>>, %arg18: memref<128x128xbf16, #tpu.memory_space<vmem>>, %arg19: memref<1x128xf32, #tpu.memory_space<vmem>>, %arg20: memref<2x8x256xf32, #tpu.memory_space<vmem>>, %arg21: memref<2x10x128xf32, #tpu.memory_space<vmem>>, %arg22: memref<2x10x128xf32, #tpu.memory_space<vmem>>, %arg23: memref<2x10x128xf32, #tpu.memory_space<vmem>>, %arg24: memref<2x16x128xf32, #tpu.memory_space<vmem>>) attributes {dimension_semantics = [], scalar_prefetch = 0 : i64, scratch_operands = 4 : i64, tpu.core_type = #tpu.core_type<tc>} {
    %cst = arith.constant 0.000000e+00 : f32
    %0 = vector.broadcast %cst : f32 to vector<2x1x128xf32>
    %c0 = arith.constant 0 : index
    %c0_0 = arith.constant 0 : index
    %c0_1 = arith.constant 0 : index
    %1 = vector.load %arg21[%c0, %c0_0, %c0_1] : memref<2x10x128xf32, #tpu.memory_space<vmem>>, vector<2x1x128xf32>
    tpu.vector_store %arg21[%c0, %c0_0, %c0_1], %0 {strides = array<i32>} : memref<2x10x128xf32, #tpu.memory_space<vmem>>, vector<2x1x128xf32>,
    %cst_2 = arith.constant 0.000000e+00 : f32
    %2 = vector.broadcast %cst_2 : f32 to vector<2x1x128xf32>
    %c0_3 = arith.constant 0 : index
    %c9 = arith.constant 9 : index
    %c0_4 = arith.constant 0 : index
    %3 = vector.load %arg21[%c0_3, %c9, %c0_4] : memref<2x10x128xf32, #tpu.memory_space<vmem>>, vector<2x1x128xf32>
    tpu.vector_store %arg21[%c0_3, %c9, %c0_4], %2 {strides = array<i32>} : memref<2x10x128xf32, #tpu.memory_space<vmem>>, vector<2x1x128xf32>,
    %cst_5 = arith.constant 0.000000e+00 : f32
    %4 = vector.broadcast %cst_5 : f32 to vector<2x1x128xf32>
    %c0_6 = arith.constant 0 : index
    %c0_7 = arith.constant 0 : index
    %c0_8 = arith.constant 0 : index
    %5 = vector.load %arg22[%c0_6, %c0_7, %c0_8] : memref<2x10x128xf32, #tpu.memory_space<vmem>>, vector<2x1x128xf32>
    tpu.vector_store %arg22[%c0_6, %c0_7, %c0_8], %4 {strides = array<i32>} : memref<2x10x128xf32, #tpu.memory_space<vmem>>, vector<2x1x128xf32>,
    %cst_9 = arith.constant 0.000000e+00 : f32
    %6 = vector.broadcast %cst_9 : f32 to vector<2x1x128xf32>
    %c0_10 = arith.constant 0 : index
    %c9_11 = arith.constant 9 : index
    %c0_12 = arith.constant 0 : index
    %7 = vector.load %arg22[%c0_10, %c9_11, %c0_12] : memref<2x10x128xf32, #tpu.memory_space<vmem>>, vector<2x1x128xf32>
    tpu.vector_store %arg22[%c0_10, %c9_11, %c0_12], %6 {strides = array<i32>} : memref<2x10x128xf32, #tpu.memory_space<vmem>>, vector<2x1x128xf32>,
    %cst_13 = arith.constant 0.000000e+00 : f32
    %8 = vector.broadcast %cst_13 : f32 to vector<2x1x128xf32>
    %c0_14 = arith.constant 0 : index
    %c0_15 = arith.constant 0 : index
    %c0_16 = arith.constant 0 : index
    %9 = vector.load %arg23[%c0_14, %c0_15, %c0_16] : memref<2x10x128xf32, #tpu.memory_space<vmem>>, vector<2x1x128xf32>
    tpu.vector_store %arg23[%c0_14, %c0_15, %c0_16], %8 {strides = array<i32>} : memref<2x10x128xf32, #tpu.memory_space<vmem>>, vector<2x1x128xf32>,
    %cst_17 = arith.constant 0.000000e+00 : f32
    %10 = vector.broadcast %cst_17 : f32 to vector<2x1x128xf32>
    %c0_18 = arith.constant 0 : index
    %c9_19 = arith.constant 9 : index
    %c0_20 = arith.constant 0 : index
    %11 = vector.load %arg23[%c0_18, %c9_19, %c0_20] : memref<2x10x128xf32, #tpu.memory_space<vmem>>, vector<2x1x128xf32>
    tpu.vector_store %arg23[%c0_18, %c9_19, %c0_20], %10 {strides = array<i32>} : memref<2x10x128xf32, #tpu.memory_space<vmem>>, vector<2x1x128xf32>,
    %c0_21 = arith.constant 0 : index
    %c0_22 = arith.constant 0 : index
    %c0_23 = arith.constant 0 : index
    %12 = vector.load %arg1[%c0_21, %c0_22, %c0_23] : memref<2x8x128xf32, #tpu.memory_space<vmem>>, vector<2x8x128xf32>
    %c0_24 = arith.constant 0 : index
    %c1 = arith.constant 1 : index
    %c0_25 = arith.constant 0 : index
    %13 = vector.load %arg21[%c0_24, %c1, %c0_25] : memref<2x10x128xf32, #tpu.memory_space<vmem>>, vector<2x8x128xf32>
    tpu.vector_store %arg21[%c0_24, %c1, %c0_25], %12 {strides = array<i32>} : memref<2x10x128xf32, #tpu.memory_space<vmem>>, vector<2x8x128xf32>,
    %c0_26 = arith.constant 0 : index
    %c0_27 = arith.constant 0 : index
    %c0_28 = arith.constant 0 : index
    %14 = vector.load %arg21[%c0_26, %c0_27, %c0_28] : memref<2x10x128xf32, #tpu.memory_space<vmem>>, vector<2x8x128xf32>
    %c0_29 = arith.constant 0 : index
    %c2 = arith.constant 2 : index
    %c0_30 = arith.constant 0 : index
    %15 = vector.load %arg21[%c0_29, %c2, %c0_30] : memref<2x10x128xf32, #tpu.memory_space<vmem>>, vector<2x8x128xf32>
    %16 = tpu.concatenate %14, %12, %15 in 2 : vector<2x8x128xf32>, vector<2x8x128xf32>, vector<2x8x128xf32> -> vector<2x8x384xf32>
    %17 = vector.shape_cast %16 : vector<2x8x384xf32> to vector<16x384xf32>
    %18 = arith.truncf %17 : vector<16x384xf32> to vector<16x384xbf16>
    %c0_31 = arith.constant 0 : index
    %c0_32 = arith.constant 0 : index
    %19 = vector.load %arg2[%c0_31, %c0_32] : memref<384x256xbf16, #tpu.memory_space<vmem>>, vector<384x256xbf16>
    %cst_33 = arith.constant dense<0.000000e+00> : vector<16x256xf32>
    %20 = tpu.matmul %18, %19, %cst_33 {dimension_numbers = #tpu.dot_dimension_numbers<[1], [0], [0], [1], [0, 0, 1, 1], [], []>} : vector<16x384xbf16>, vector<384x256xbf16>, vector<16x256xf32> -> vector<16x256xf32>
    %c0_34 = arith.constant 0 : index
    %c0_35 = arith.constant 0 : index
    %21 = vector.load %arg3[%c0_34, %c0_35] : memref<1x256xf32, #tpu.memory_space<vmem>>, vector<1x256xf32>
    %22 = vector.broadcast %21 : vector<1x256xf32> to vector<16x256xf32>
    %23 = arith.addf %20, %22 : vector<16x256xf32>
    %cst_36 = arith.constant 0.000000e+00 : f32
    %24 = vector.broadcast %cst_36 : f32 to vector<16x256xf32>
    %25 = arith.cmpf oge, %23, %24 : vector<16x256xf32>
    %cst_37 = arith.constant 2.000000e-01 : f32
    %26 = vector.broadcast %cst_37 : f32 to vector<16x256xf32>
    %27 = arith.mulf %26, %23 : vector<16x256xf32>
    %28 = arith.select %25, %23, %27 : vector<16x256xi1>, vector<16x256xf32>
    %29 = vector.extract_strided_slice %28 {offsets = [0, 0], sizes = [16, 128], strides = [1, 1]} : vector<16x256xf32> to vector<16x128xf32>
    %30 = vector.extract_strided_slice %28 {offsets = [0, 128], sizes = [16, 128], strides = [1, 1]} : vector<16x256xf32> to vector<16x128xf32>
    %c0_38 = arith.constant 0 : index
    %c0_39 = arith.constant 0 : index
    %31 = vector.load %arg4[%c0_38, %c0_39] : memref<1x128xf32, #tpu.memory_space<vmem>>, vector<1x128xf32>
    %c0_40 = arith.constant 0 : index
    %c0_41 = arith.constant 0 : index
    %32 = vector.load %arg5[%c0_40, %c0_41] : memref<1x128xf32, #tpu.memory_space<vmem>>, vector<1x128xf32>
    %cst_42 = arith.constant dense<0.000000e+00> : vector<128xf32>
    %33 = vector.multi_reduction <add>, %29, %cst_42 [0] : vector<16x128xf32> to vector<128xf32>
    %34 = vector.shape_cast %33 : vector<128xf32> to vector<1x128xf32>
    %cst_43 = arith.constant dense<0.000000e+00> : vector<128xf32>
    %35 = vector.multi_reduction <add>, %30, %cst_43 [0] : vector<16x128xf32> to vector<128xf32>
    %36 = vector.shape_cast %35 : vector<128xf32> to vector<1x128xf32>
    %37 = arith.addf %34, %36 : vector<1x128xf32>
    %cst_44 = arith.constant 3.200000e+01 : f32
    %38 = vector.broadcast %cst_44 : f32 to vector<1x128xf32>
    %39 = arith.divf %37, %38 : vector<1x128xf32>
    %40 = vector.broadcast %39 : vector<1x128xf32> to vector<16x128xf32>
    %41 = arith.subf %29, %40 : vector<16x128xf32>
    %42 = vector.broadcast %39 : vector<1x128xf32> to vector<16x128xf32>
    %43 = arith.subf %30, %42 : vector<16x128xf32>
    %44 = arith.mulf %41, %41 : vector<16x128xf32>
    %cst_45 = arith.constant dense<0.000000e+00> : vector<128xf32>
    %45 = vector.multi_reduction <add>, %44, %cst_45 [0] : vector<16x128xf32> to vector<128xf32>
    %46 = vector.shape_cast %45 : vector<128xf32> to vector<1x128xf32>
    %47 = arith.mulf %43, %43 : vector<16x128xf32>
    %cst_46 = arith.constant dense<0.000000e+00> : vector<128xf32>
    %48 = vector.multi_reduction <add>, %47, %cst_46 [0] : vector<16x128xf32> to vector<128xf32>
    %49 = vector.shape_cast %48 : vector<128xf32> to vector<1x128xf32>
    %50 = arith.addf %46, %49 : vector<1x128xf32>
    %cst_47 = arith.constant 3.200000e+01 : f32
    %51 = vector.broadcast %cst_47 : f32 to vector<1x128xf32>
    %52 = arith.divf %50, %51 : vector<1x128xf32>
    %cst_48 = arith.constant 9.99999974E-6 : f32
    %53 = vector.broadcast %cst_48 : f32 to vector<1x128xf32>
    %54 = arith.addf %52, %53 : vector<1x128xf32>
    %55 = math.rsqrt %54 : vector<1x128xf32>
    %56 = arith.mulf %55, %31 : vector<1x128xf32>
    %57 = vector.broadcast %56 : vector<1x128xf32> to vector<16x128xf32>
    %58 = arith.mulf %41, %57 : vector<16x128xf32>
    %59 = vector.broadcast %32 : vector<1x128xf32> to vector<16x128xf32>
    %60 = arith.addf %58, %59 : vector<16x128xf32>
    %61 = vector.broadcast %56 : vector<1x128xf32> to vector<16x128xf32>
    %62 = arith.mulf %43, %61 : vector<16x128xf32>
    %63 = vector.broadcast %32 : vector<1x128xf32> to vector<16x128xf32>
    %64 = arith.addf %62, %63 : vector<16x128xf32>
    %c0_49 = arith.constant 0 : index
    %c0_50 = arith.constant 0 : index
    %65 = vector.load %arg6[%c0_49, %c0_50] : memref<1x128xf32, #tpu.memory_space<vmem>>, vector<1x128xf32>
    %c0_51 = arith.constant 0 : index
    %c0_52 = arith.constant 0 : index
    %66 = vector.load %arg7[%c0_51, %c0_52] : memref<1x128xf32, #tpu.memory_space<vmem>>, vector<1x128xf32>
    %cst_53 = arith.constant dense<0.000000e+00> : vector<128xf32>
    %67 = vector.multi_reduction <add>, %60, %cst_53 [0] : vector<16x128xf32> to vector<128xf32>
    %68 = vector.shape_cast %67 : vector<128xf32> to vector<1x128xf32>
    %cst_54 = arith.constant dense<0.000000e+00> : vector<128xf32>
    %69 = vector.multi_reduction <add>, %64, %cst_54 [0] : vector<16x128xf32> to vector<128xf32>
    %70 = vector.shape_cast %69 : vector<128xf32> to vector<1x128xf32>
    %71 = arith.addf %68, %70 : vector<1x128xf32>
    %cst_55 = arith.constant 3.200000e+01 : f32
    %72 = vector.broadcast %cst_55 : f32 to vector<1x128xf32>
    %73 = arith.divf %71, %72 : vector<1x128xf32>
    %74 = vector.broadcast %73 : vector<1x128xf32> to vector<16x128xf32>
    %75 = arith.subf %60, %74 : vector<16x128xf32>
    %76 = vector.broadcast %73 : vector<1x128xf32> to vector<16x128xf32>
    %77 = arith.subf %64, %76 : vector<16x128xf32>
    %78 = arith.mulf %75, %75 : vector<16x128xf32>
    %cst_56 = arith.constant dense<0.000000e+00> : vector<128xf32>
    %79 = vector.multi_reduction <add>, %78, %cst_56 [0] : vector<16x128xf32> to vector<128xf32>
    %80 = vector.shape_cast %79 : vector<128xf32> to vector<1x128xf32>
    %81 = arith.mulf %77, %77 : vector<16x128xf32>
    %cst_57 = arith.constant dense<0.000000e+00> : vector<128xf32>
    %82 = vector.multi_reduction <add>, %81, %cst_57 [0] : vector<16x128xf32> to vector<128xf32>
    %83 = vector.shape_cast %82 : vector<128xf32> to vector<1x128xf32>
    %84 = arith.addf %80, %83 : vector<1x128xf32>
    %cst_58 = arith.constant 3.200000e+01 : f32
    %85 = vector.broadcast %cst_58 : f32 to vector<1x128xf32>
    %86 = arith.divf %84, %85 : vector<1x128xf32>
    %cst_59 = arith.constant 9.99999974E-6 : f32
    %87 = vector.broadcast %cst_59 : f32 to vector<1x128xf32>
    %88 = arith.addf %86, %87 : vector<1x128xf32>
    %89 = math.rsqrt %88 : vector<1x128xf32>
    %90 = arith.mulf %89, %65 : vector<1x128xf32>
    %91 = vector.broadcast %90 : vector<1x128xf32> to vector<16x128xf32>
    %92 = arith.mulf %75, %91 : vector<16x128xf32>
    %93 = vector.broadcast %66 : vector<1x128xf32> to vector<16x128xf32>
    %94 = arith.addf %92, %93 : vector<16x128xf32>
    %95 = vector.broadcast %90 : vector<1x128xf32> to vector<16x128xf32>
    %96 = arith.mulf %77, %95 : vector<16x128xf32>
    %97 = vector.broadcast %66 : vector<1x128xf32> to vector<16x128xf32>
    %98 = arith.addf %96, %97 : vector<16x128xf32>
    %cst_60 = arith.constant 0.000000e+00 : f32
    %99 = vector.broadcast %cst_60 : f32 to vector<16x128xf32>
    %100 = arith.cmpf oge, %94, %99 : vector<16x128xf32>
    %cst_61 = arith.constant 2.000000e-01 : f32
    %101 = vector.broadcast %cst_61 : f32 to vector<16x128xf32>
    %102 = arith.mulf %101, %94 : vector<16x128xf32>
    %103 = arith.select %100, %94, %102 : vector<16x128xi1>, vector<16x128xf32>
    %cst_62 = arith.constant 0.000000e+00 : f32
    %104 = vector.broadcast %cst_62 : f32 to vector<16x128xf32>
    %105 = arith.cmpf oge, %98, %104 : vector<16x128xf32>
    %cst_63 = arith.constant 2.000000e-01 : f32
    %106 = vector.broadcast %cst_63 : f32 to vector<16x128xf32>
    %107 = arith.mulf %106, %98 : vector<16x128xf32>
    %108 = arith.select %105, %98, %107 : vector<16x128xi1>, vector<16x128xf32>
    %c0_64 = arith.constant 0 : index
    %c0_65 = arith.constant 0 : index
    %109 = vector.load %arg8[%c0_64, %c0_65] : memref<512x256xbf16, #tpu.memory_space<vmem>>, vector<512x256xbf16>
    %c0_66 = arith.constant 0 : index
    %c0_67 = arith.constant 0 : index
    %110 = vector.load %arg9[%c0_66, %c0_67] : memref<1x256xf32, #tpu.memory_space<vmem>>, vector<1x256xf32>
    %111 = vector.shape_cast %103 : vector<16x128xf32> to vector<2x8x128xf32>
    %112 = vector.shape_cast %108 : vector<16x128xf32> to vector<2x8x128xf32>
    %c0_68 = arith.constant 0 : index
    %c1_69 = arith.constant 1 : index
    %c0_70 = arith.constant 0 : index
    %113 = vector.load %arg23[%c0_68, %c1_69, %c0_70] : memref<2x10x128xf32, #tpu.memory_space<vmem>>, vector<2x8x128xf32>
    tpu.vector_store %arg23[%c0_68, %c1_69, %c0_70], %112 {strides = array<i32>} : memref<2x10x128xf32, #tpu.memory_space<vmem>>, vector<2x8x128xf32>,
    %c0_71 = arith.constant 0 : index
    %c1_72 = arith.constant 1 : index
    %c0_73 = arith.constant 0 : index
    %114 = vector.load %arg22[%c0_71, %c1_72, %c0_73] : memref<2x10x128xf32, #tpu.memory_space<vmem>>, vector<2x8x128xf32>
    tpu.vector_store %arg22[%c0_71, %c1_72, %c0_73], %111 {strides = array<i32>} : memref<2x10x128xf32, #tpu.memory_space<vmem>>, vector<2x8x128xf32>,
    %c0_74 = arith.constant 0 : index
    %c0_75 = arith.constant 0 : index
    %c0_76 = arith.constant 0 : index
    %115 = vector.load %arg23[%c0_74, %c0_75, %c0_76] : memref<2x10x128xf32, #tpu.memory_space<vmem>>, vector<2x8x128xf32>
    %c0_77 = arith.constant 0 : index
    %c2_78 = arith.constant 2 : index
    %c0_79 = arith.constant 0 : index
    %116 = vector.load %arg22[%c0_77, %c2_78, %c0_79] : memref<2x10x128xf32, #tpu.memory_space<vmem>>, vector<2x8x128xf32>
    %117 = tpu.concatenate %115, %111, %112, %116 in 2 : vector<2x8x128xf32>, vector<2x8x128xf32>, vector<2x8x128xf32>, vector<2x8x128xf32> -> vector<2x8x512xf32>
    %118 = vector.shape_cast %117 : vector<2x8x512xf32> to vector<16x512xf32>
    %119 = arith.truncf %118 : vector<16x512xf32> to vector<16x512xbf16>
    %cst_80 = arith.constant dense<0.000000e+00> : vector<16x256xf32>
    %120 = tpu.matmul %119, %109, %cst_80 {dimension_numbers = #tpu.dot_dimension_numbers<[1], [0], [0], [1], [0, 0, 1, 1], [], []>} : vector<16x512xbf16>, vector<512x256xbf16>, vector<16x256xf32> -> vector<16x256xf32>
    %121 = vector.broadcast %110 : vector<1x256xf32> to vector<16x256xf32>
    %122 = arith.addf %120, %121 : vector<16x256xf32>
    %123 = vector.extract_strided_slice %122 {offsets = [0, 0], sizes = [16, 128], strides = [1, 1]} : vector<16x256xf32> to vector<16x128xf32>
    %124 = vector.extract_strided_slice %122 {offsets = [0, 128], sizes = [16, 128], strides = [1, 1]} : vector<16x256xf32> to vector<16x128xf32>
    %c0_81 = arith.constant 0 : index
    %c0_82 = arith.constant 0 : index
    %125 = vector.load %arg10[%c0_81, %c0_82] : memref<1x128xf32, #tpu.memory_space<vmem>>, vector<1x128xf32>
    %c0_83 = arith.constant 0 : index
    %c0_84 = arith.constant 0 : index
    %126 = vector.load %arg11[%c0_83, %c0_84] : memref<1x128xf32, #tpu.memory_space<vmem>>, vector<1x128xf32>
    %cst_85 = arith.constant dense<0.000000e+00> : vector<128xf32>
    %127 = vector.multi_reduction <add>, %123, %cst_85 [0] : vector<16x128xf32> to vector<128xf32>
    %128 = vector.shape_cast %127 : vector<128xf32> to vector<1x128xf32>
    %cst_86 = arith.constant dense<0.000000e+00> : vector<128xf32>
    %129 = vector.multi_reduction <add>, %124, %cst_86 [0] : vector<16x128xf32> to vector<128xf32>
    %130 = vector.shape_cast %129 : vector<128xf32> to vector<1x128xf32>
    %131 = arith.addf %128, %130 : vector<1x128xf32>
    %cst_87 = arith.constant 3.200000e+01 : f32
    %132 = vector.broadcast %cst_87 : f32 to vector<1x128xf32>
    %133 = arith.divf %131, %132 : vector<1x128xf32>
    %134 = vector.broadcast %133 : vector<1x128xf32> to vector<16x128xf32>
    %135 = arith.subf %123, %134 : vector<16x128xf32>
    %136 = vector.broadcast %133 : vector<1x128xf32> to vector<16x128xf32>
    %137 = arith.subf %124, %136 : vector<16x128xf32>
    %138 = arith.mulf %135, %135 : vector<16x128xf32>
    %cst_88 = arith.constant dense<0.000000e+00> : vector<128xf32>
    %139 = vector.multi_reduction <add>, %138, %cst_88 [0] : vector<16x128xf32> to vector<128xf32>
    %140 = vector.shape_cast %139 : vector<128xf32> to vector<1x128xf32>
    %141 = arith.mulf %137, %137 : vector<16x128xf32>
    %cst_89 = arith.constant dense<0.000000e+00> : vector<128xf32>
    %142 = vector.multi_reduction <add>, %141, %cst_89 [0] : vector<16x128xf32> to vector<128xf32>
    %143 = vector.shape_cast %142 : vector<128xf32> to vector<1x128xf32>
    %144 = arith.addf %140, %143 : vector<1x128xf32>
    %cst_90 = arith.constant 3.200000e+01 : f32
    %145 = vector.broadcast %cst_90 : f32 to vector<1x128xf32>
    %146 = arith.divf %144, %145 : vector<1x128xf32>
    %cst_91 = arith.constant 9.99999974E-6 : f32
    %147 = vector.broadcast %cst_91 : f32 to vector<1x128xf32>
    %148 = arith.addf %146, %147 : vector<1x128xf32>
    %149 = math.rsqrt %148 : vector<1x128xf32>
    %150 = arith.mulf %149, %125 : vector<1x128xf32>
    %151 = vector.broadcast %150 : vector<1x128xf32> to vector<16x128xf32>
    %152 = arith.mulf %135, %151 : vector<16x128xf32>
    %153 = vector.broadcast %126 : vector<1x128xf32> to vector<16x128xf32>
    %154 = arith.addf %152, %153 : vector<16x128xf32>
    %155 = vector.broadcast %150 : vector<1x128xf32> to vector<16x128xf32>
    %156 = arith.mulf %137, %155 : vector<16x128xf32>
    %157 = vector.broadcast %126 : vector<1x128xf32> to vector<16x128xf32>
    %158 = arith.addf %156, %157 : vector<16x128xf32>
    %cst_92 = arith.constant 0.000000e+00 : f32
    %159 = vector.broadcast %cst_92 : f32 to vector<16x128xf32>
    %160 = arith.cmpf oge, %154, %159 : vector<16x128xf32>
    %cst_93 = arith.constant 2.000000e-01 : f32
    %161 = vector.broadcast %cst_93 : f32 to vector<16x128xf32>
    %162 = arith.mulf %161, %154 : vector<16x128xf32>
    %163 = arith.select %160, %154, %162 : vector<16x128xi1>, vector<16x128xf32>
    %cst_94 = arith.constant 0.000000e+00 : f32
    %164 = vector.broadcast %cst_94 : f32 to vector<16x128xf32>
    %165 = arith.cmpf oge, %158, %164 : vector<16x128xf32>
    %cst_95 = arith.constant 2.000000e-01 : f32
    %166 = vector.broadcast %cst_95 : f32 to vector<16x128xf32>
    %167 = arith.mulf %166, %158 : vector<16x128xf32>
    %168 = arith.select %165, %158, %167 : vector<16x128xi1>, vector<16x128xf32>
    %c0_96 = arith.constant 0 : index
    %c0_97 = arith.constant 0 : index
    %169 = vector.load %arg12[%c0_96, %c0_97] : memref<512x256xbf16, #tpu.memory_space<vmem>>, vector<512x256xbf16>
    %c0_98 = arith.constant 0 : index
    %c0_99 = arith.constant 0 : index
    %170 = vector.load %arg13[%c0_98, %c0_99] : memref<1x256xf32, #tpu.memory_space<vmem>>, vector<1x256xf32>
    %171 = vector.shape_cast %163 : vector<16x128xf32> to vector<2x8x128xf32>
    %172 = vector.shape_cast %168 : vector<16x128xf32> to vector<2x8x128xf32>
    %c0_100 = arith.constant 0 : index
    %c1_101 = arith.constant 1 : index
    %c0_102 = arith.constant 0 : index
    %173 = vector.load %arg23[%c0_100, %c1_101, %c0_102] : memref<2x10x128xf32, #tpu.memory_space<vmem>>, vector<2x8x128xf32>
    tpu.vector_store %arg23[%c0_100, %c1_101, %c0_102], %172 {strides = array<i32>} : memref<2x10x128xf32, #tpu.memory_space<vmem>>, vector<2x8x128xf32>,
    %c0_103 = arith.constant 0 : index
    %c1_104 = arith.constant 1 : index
    %c0_105 = arith.constant 0 : index
    %174 = vector.load %arg22[%c0_103, %c1_104, %c0_105] : memref<2x10x128xf32, #tpu.memory_space<vmem>>, vector<2x8x128xf32>
    tpu.vector_store %arg22[%c0_103, %c1_104, %c0_105], %171 {strides = array<i32>} : memref<2x10x128xf32, #tpu.memory_space<vmem>>, vector<2x8x128xf32>,
    %c0_106 = arith.constant 0 : index
    %c0_107 = arith.constant 0 : index
    %c0_108 = arith.constant 0 : index
    %175 = vector.load %arg23[%c0_106, %c0_107, %c0_108] : memref<2x10x128xf32, #tpu.memory_space<vmem>>, vector<2x8x128xf32>
    %c0_109 = arith.constant 0 : index
    %c2_110 = arith.constant 2 : index
    %c0_111 = arith.constant 0 : index
    %176 = vector.load %arg22[%c0_109, %c2_110, %c0_111] : memref<2x10x128xf32, #tpu.memory_space<vmem>>, vector<2x8x128xf32>
    %177 = tpu.concatenate %175, %171, %172, %176 in 2 : vector<2x8x128xf32>, vector<2x8x128xf32>, vector<2x8x128xf32>, vector<2x8x128xf32> -> vector<2x8x512xf32>
    %178 = vector.shape_cast %177 : vector<2x8x512xf32> to vector<16x512xf32>
    %179 = arith.truncf %178 : vector<16x512xf32> to vector<16x512xbf16>
    %cst_112 = arith.constant dense<0.000000e+00> : vector<16x256xf32>
    %180 = tpu.matmul %179, %169, %cst_112 {dimension_numbers = #tpu.dot_dimension_numbers<[1], [0], [0], [1], [0, 0, 1, 1], [], []>} : vector<16x512xbf16>, vector<512x256xbf16>, vector<16x256xf32> -> vector<16x256xf32>
    %181 = vector.broadcast %170 : vector<1x256xf32> to vector<16x256xf32>
    %182 = arith.addf %180, %181 : vector<16x256xf32>
    %183 = vector.extract_strided_slice %182 {offsets = [0, 0], sizes = [16, 128], strides = [1, 1]} : vector<16x256xf32> to vector<16x128xf32>
    %184 = vector.extract_strided_slice %182 {offsets = [0, 128], sizes = [16, 128], strides = [1, 1]} : vector<16x256xf32> to vector<16x128xf32>
    %185 = arith.addf %183, %60 : vector<16x128xf32>
    %186 = arith.addf %184, %64 : vector<16x128xf32>
    %187 = vector.shape_cast %185 : vector<16x128xf32> to vector<2x8x128xf32>
    %c0_113 = arith.constant 0 : index
    %c0_114 = arith.constant 0 : index
    %c0_115 = arith.constant 0 : index
    %188 = vector.load %arg24[%c0_113, %c0_114, %c0_115] : memref<2x16x128xf32, #tpu.memory_space<vmem>>, vector<2x8x128xf32>
    tpu.vector_store %arg24[%c0_113, %c0_114, %c0_115], %187 {strides = array<i32>} : memref<2x16x128xf32, #tpu.memory_space<vmem>>, vector<2x8x128xf32>,
    %189 = vector.shape_cast %186 : vector<16x128xf32> to vector<2x8x128xf32>
    %c0_116 = arith.constant 0 : index
    %c8 = arith.constant 8 : index
    %c0_117 = arith.constant 0 : index
    %190 = vector.load %arg24[%c0_116, %c8, %c0_117] : memref<2x16x128xf32, #tpu.memory_space<vmem>>, vector<2x8x128xf32>
    tpu.vector_store %arg24[%c0_116, %c8, %c0_117], %189 {strides = array<i32>} : memref<2x16x128xf32, #tpu.memory_space<vmem>>, vector<2x8x128xf32>,
    %c0_118 = arith.constant 0 : index
    %c0_119 = arith.constant 0 : index
    %c0_120 = arith.constant 0 : index
    %191 = vector.load %arg24[%c0_118, %c0_119, %c0_120] : memref<2x16x128xf32, #tpu.memory_space<vmem>>, vector<2x16x128xf32>
    %192 = vector.shape_cast %191 : vector<2x16x128xf32> to vector<32x128xf32>
    %193 = arith.truncf %192 : vector<32x128xf32> to vector<32x128xbf16>
    %c0_121 = arith.constant 0 : index
    %c0_122 = arith.constant 0 : index
    %194 = vector.load %arg14[%c0_121, %c0_122] : memref<128x16xbf16, #tpu.memory_space<vmem>>, vector<128x16xbf16>
    %cst_123 = arith.constant dense<0.000000e+00> : vector<32x16xf32>
    %195 = tpu.matmul %193, %194, %cst_123 {dimension_numbers = #tpu.dot_dimension_numbers<[1], [0], [0], [1], [0, 0, 1, 1], [], []>} : vector<32x128xbf16>, vector<128x16xbf16>, vector<32x16xf32> -> vector<32x16xf32>
    %c0_124 = arith.constant 0 : index
    %c0_125 = arith.constant 0 : index
    %196 = vector.load %arg15[%c0_124, %c0_125] : memref<1x16xf32, #tpu.memory_space<vmem>>, vector<1x16xf32>
    %197 = vector.broadcast %196 : vector<1x16xf32> to vector<32x16xf32>
    %198 = arith.addf %195, %197 : vector<32x16xf32>
    %c0_126 = arith.constant 0 : index
    %c0_127 = arith.constant 0 : index
    %199 = vector.load %arg16[%c0_126, %c0_127] : memref<128x16xbf16, #tpu.memory_space<vmem>>, vector<128x16xbf16>
    %cst_128 = arith.constant dense<0.000000e+00> : vector<32x16xf32>
    %200 = tpu.matmul %193, %199, %cst_128 {dimension_numbers = #tpu.dot_dimension_numbers<[1], [0], [0], [1], [0, 0, 1, 1], [], []>} : vector<32x128xbf16>, vector<128x16xbf16>, vector<32x16xf32> -> vector<32x16xf32>
    %c0_129 = arith.constant 0 : index
    %c0_130 = arith.constant 0 : index
    %201 = vector.load %arg17[%c0_129, %c0_130] : memref<1x16xf32, #tpu.memory_space<vmem>>, vector<1x16xf32>
    %202 = vector.broadcast %201 : vector<1x16xf32> to vector<32x16xf32>
    %203 = arith.addf %200, %202 : vector<32x16xf32>
    %c0_131 = arith.constant 0 : index
    %c0_132 = arith.constant 0 : index
    %204 = vector.load %arg18[%c0_131, %c0_132] : memref<128x128xbf16, #tpu.memory_space<vmem>>, vector<128x128xbf16>
    %cst_133 = arith.constant dense<0.000000e+00> : vector<32x128xf32>
    %205 = tpu.matmul %193, %204, %cst_133 {dimension_numbers = #tpu.dot_dimension_numbers<[1], [0], [0], [1], [0, 0, 1, 1], [], []>} : vector<32x128xbf16>, vector<128x128xbf16>, vector<32x128xf32> -> vector<32x128xf32>
    %c0_134 = arith.constant 0 : index
    %c0_135 = arith.constant 0 : index
    %206 = vector.load %arg19[%c0_134, %c0_135] : memref<1x128xf32, #tpu.memory_space<vmem>>, vector<1x128xf32>
    %207 = vector.broadcast %206 : vector<1x128xf32> to vector<32x128xf32>
    %208 = arith.addf %205, %207 : vector<32x128xf32>
    %209 = vector.shape_cast %198 : vector<32x16xf32> to vector<2x16x16xf32>
    %210 = arith.truncf %209 : vector<2x16x16xf32> to vector<2x16x16xbf16>
    %211 = vector.shape_cast %203 : vector<32x16xf32> to vector<2x16x16xf32>
    %212 = arith.truncf %211 : vector<2x16x16xf32> to vector<2x16x16xbf16>
    %213 = vector.shape_cast %208 : vector<32x128xf32> to vector<2x16x128xf32>
    %214 = arith.truncf %213 : vector<2x16x128xf32> to vector<2x16x128xbf16>
    "tpu.trace_start"() <{level = 10 : i32, message = "bqc,bkc->bqk"}> : () -> ()
    %cst_136 = arith.constant dense<0.000000e+00> : vector<2x16x16xf32>
    %215 = tpu.matmul %210, %212, %cst_136 {dimension_numbers = #tpu.dot_dimension_numbers<[2], [2], [1], [1], [0, 0, 0, 1, 1, 1], [0], [0]>} : vector<2x16x16xbf16>, vector<2x16x16xbf16>, vector<2x16x16xf32> -> vector<2x16x16xf32>
    "tpu.trace_stop"() : () -> ()
    %cst_137 = arith.constant dense<0xFF800000> : vector<2x16xf32>
    %216 = vector.multi_reduction <maximumf>, %215, %cst_137 [2] : vector<2x16x16xf32> to vector<2x16xf32>
    %217 = vector.shape_cast %216 : vector<2x16xf32> to vector<2x16x1xf32>
    %218 = vector.broadcast %217 : vector<2x16x1xf32> to vector<2x16x16xf32>
    %219 = arith.subf %215, %218 : vector<2x16x16xf32>
    %220 = math.exp %219 : vector<2x16x16xf32>
    %cst_138 = arith.constant dense<0.000000e+00> : vector<2x16xf32>
    %221 = vector.multi_reduction <add>, %220, %cst_138 [2] : vector<2x16x16xf32> to vector<2x16xf32>
    %222 = vector.shape_cast %221 : vector<2x16xf32> to vector<2x16x1xf32>
    %223 = tpu.reciprocal %222 {approx = true} : vector<2x16x1xf32> -> vector<2x16x1xf32>
    %224 = vector.broadcast %223 : vector<2x16x1xf32> to vector<2x16x16xf32>
    %225 = arith.mulf %220, %224 : vector<2x16x16xf32>
    %226 = arith.truncf %225 : vector<2x16x16xf32> to vector<2x16x16xbf16>
    "tpu.trace_start"() <{level = 10 : i32, message = "bqk,bkc->bqc"}> : () -> ()
    %cst_139 = arith.constant dense<0.000000e+00> : vector<2x16x128xf32>
    %227 = tpu.matmul %226, %214, %cst_139 {dimension_numbers = #tpu.dot_dimension_numbers<[2], [1], [1], [2], [0, 0, 0, 1, 1, 2], [0], [0]>} : vector<2x16x16xbf16>, vector<2x16x128xbf16>, vector<2x16x128xf32> -> vector<2x16x128xf32>
    "tpu.trace_stop"() : () -> ()
    %c0_140 = arith.constant 0 : index
    %228 = memref.load %arg0[%c0_140] : memref<1xf32, #tpu.memory_space<smem>>
    %229 = vector.broadcast %228 : f32 to vector<2x16x128xf32>
    %230 = arith.mulf %229, %227 : vector<2x16x128xf32>
    %231 = arith.addf %230, %191 : vector<2x16x128xf32>
    %232 = vector.extract_strided_slice %231 {offsets = [0, 0, 0], sizes = [2, 8, 128], strides = [1, 1, 1]} : vector<2x16x128xf32> to vector<2x8x128xf32>
    %c0_141 = arith.constant 0 : index
    %c0_142 = arith.constant 0 : index
    %c0_143 = arith.constant 0 : index
    %233 = vector.load %arg20[%c0_141, %c0_142, %c0_143] : memref<2x8x256xf32, #tpu.memory_space<vmem>>, vector<2x8x128xf32>
    tpu.vector_store %arg20[%c0_141, %c0_142, %c0_143], %232 {strides = array<i32>} : memref<2x8x256xf32, #tpu.memory_space<vmem>>, vector<2x8x128xf32>,
    %234 = vector.extract_strided_slice %231 {offsets = [0, 8, 0], sizes = [2, 8, 128], strides = [1, 1, 1]} : vector<2x16x128xf32> to vector<2x8x128xf32>
    %c0_144 = arith.constant 0 : index
    %c0_145 = arith.constant 0 : index
    %c128 = arith.constant 128 : index
    %235 = vector.load %arg20[%c0_144, %c0_145, %c128] : memref<2x8x256xf32, #tpu.memory_space<vmem>>, vector<2x8x128xf32>
    tpu.vector_store %arg20[%c0_144, %c0_145, %c128], %234 {strides = array<i32>} : memref<2x8x256xf32, #tpu.memory_space<vmem>>, vector<2x8x128xf32>,
    return
  }
}

</mosaic_0001>

<llo_original>
// kernel: tpu_custom_call.1
$region0: #{tpu_custom_call.1}
  #allocation0 [shape = 'u32[]', space=smem, size = 0x4, offset = 0x4, fixed_abs, tag = 'smem constant byte address 0x4 - core index']
  #allocation1 [shape = 'u32[144,128]{1,0:T(1,128)}', space=vmem, size = 0x12000, scoped, tag = 'internal scratch']
  #allocation2 [shape = 'f32[2,10,128]{2,1,0:T(8,128)}', space=vmem, size = 0x4000, scoped, tag = 'scratch operand']
  #allocation3 [shape = 'f32[2,10,128]{2,1,0:T(8,128)}', space=vmem, size = 0x4000, scoped, tag = 'scratch operand']
  #allocation4 [shape = 'f32[2,10,128]{2,1,0:T(8,128)}', space=vmem, size = 0x4000, scoped, tag = 'scratch operand']
  #allocation5 [shape = 'f32[2,16,128]{2,1,0:T(8,128)}', space=vmem, size = 0x4000, scoped, tag = 'scratch operand']
  #allocation6 [shape = 'f32[1]{0:T(128)S(6)}', space=smem, size = 0x200, scoped, tag = 'scoped memory for tpu_custom_call.1']
  %s0 = inlined_call_operand.<no memory space> [shape: f32[1], index: 0, kind: input, shape index: {}]
  %s1 = inlined_call_operand.vmem [shape: f32[2,8,128], index: 1, kind: input, shape index: {}]
  %s2 = inlined_call_operand.hbm [shape: bf16[384,256], index: 2, kind: input, shape index: {}]
  %s3 = inlined_call_operand.vmem [shape: f32[1,256], index: 3, kind: input, shape index: {}]
  %s4 = inlined_call_operand.vmem [shape: f32[1,128], index: 4, kind: input, shape index: {}]
  %s5 = inlined_call_operand.vmem [shape: f32[1,128], index: 5, kind: input, shape index: {}]
  %s6 = inlined_call_operand.vmem [shape: f32[1,128], index: 6, kind: input, shape index: {}]
  %s7 = inlined_call_operand.vmem [shape: f32[1,128], index: 7, kind: input, shape index: {}]
  %s8 = inlined_call_operand.hbm [shape: bf16[512,256], index: 8, kind: input, shape index: {}]
  %s9 = inlined_call_operand.vmem [shape: f32[1,256], index: 9, kind: input, shape index: {}]
  %s10 = inlined_call_operand.vmem [shape: f32[1,128], index: 10, kind: input, shape index: {}]
  %s11 = inlined_call_operand.vmem [shape: f32[1,128], index: 11, kind: input, shape index: {}]
  %s12 = inlined_call_operand.hbm [shape: bf16[512,256], index: 12, kind: input, shape index: {}]
  %s13 = inlined_call_operand.vmem [shape: f32[1,256], index: 13, kind: input, shape index: {}]
  %s14 = inlined_call_operand.vmem [shape: bf16[128,16], index: 14, kind: input, shape index: {}]
  %s15 = inlined_call_operand.vmem [shape: f32[1,16], index: 15, kind: input, shape index: {}]
  %s16 = inlined_call_operand.vmem [shape: bf16[128,16], index: 16, kind: input, shape index: {}]
  %s17 = inlined_call_operand.vmem [shape: f32[1,16], index: 17, kind: input, shape index: {}]
  %s18 = inlined_call_operand.vmem [shape: bf16[128,128], index: 18, kind: input, shape index: {}]
  %s19 = inlined_call_operand.vmem [shape: f32[1,128], index: 19, kind: input, shape index: {}]
  %s20 = inlined_call_operand.hbm [shape: f32[2,8,256], index: 20, kind: output, shape index: {}]
  %s21 = sld [smem:[#allocation0]]
  $region102: #{tpu_custom_call.1} parent=0
    _
  %s23 = ssub.s32 1, %s21
  %s24 = scalar_select 0, %s23, %s21
  %25 = sst [smem:[#allocation6]] %s0
  $region1: #{tpu_custom_call.1} parent=0
    #allocation7 [shape = 'u8[196608]{0}', space=vmem, size = 0x30000, scoped, tag = 'input window, operand 2, single buffered']
    #allocation8 [shape = 's32[1]{0}', space=sflag, size = 0x4, scoped, tag = 'scoped memory for tpu_custom_call.1']
    #allocation9 [shape = 's32[1]{0}', space=sflag, size = 0x4, scoped, tag = 'scoped memory for tpu_custom_call.1']
    #allocation10 [shape = 'u8[262144]{0}', space=vmem, size = 0x40000, scoped, tag = 'input window, operand 8, single buffered']
    #allocation11 [shape = 's32[1]{0}', space=sflag, size = 0x4, scoped, tag = 'scoped memory for tpu_custom_call.1']
    #allocation12 [shape = 'u8[262144]{0}', space=vmem, size = 0x40000, scoped, tag = 'input window, operand 12, single buffered']
    #allocation13 [shape = 'u8[16384]{0}', space=vmem, size = 0x4000, scoped, tag = 'output window, operand 0, single buffered']
    %26 = vsyncpa [#allocation8], 0
    %27 = vsyncpa [#allocation11], 0
    %28 = vsyncpa [#allocation9], 0
    // Predicated region
    $region2: #{tpu_custom_call.1} parent=1 // pred_check
      _
    $region3: #{tpu_custom_call.1} parent=1 // pred_check_branch
      %30 = sbr.rel (0) target = $region5
    $region4: #{tpu_custom_call.1} parent=1 // pred_region
      _
    $region5: #{tpu_custom_call.1} parent=1 // pred_fallthru
      _
    // Predicated region
    $region6: #{tpu_custom_call.1} parent=1 // pred_check
      _
    $region7: #{tpu_custom_call.1} parent=1 // pred_check_branch
      %32 = sbr.rel (0) target = $region9
    $region8: #{tpu_custom_call.1} parent=1 // pred_region
      _
    $region9: #{tpu_custom_call.1} parent=1 // pred_fallthru
      _
    // Predicated region
    $region10: #{tpu_custom_call.1} parent=1 // pred_check
      _
    $region11: #{tpu_custom_call.1} parent=1 // pred_check_branch
      %34 = sbr.rel (0) target = $region13
    $region12: #{tpu_custom_call.1} parent=1 // pred_region
      %s36 = ssub.s32 6144, 6144
      %37 = vsyncadd [#allocation8], %s36
      %s38 = sshll.u32 [#allocation7], 4
      %s39 = int_to_ptr.vmem [resolvable:$true] %s38
      %44 = dma.hbm_to_vmem [thread:$0]  %s2, 6144, %s39, [#allocation8], 128, 128, 8
    $region13: #{tpu_custom_call.1} parent=1 // pred_fallthru
      _
    // Predicated region
    $region14: #{tpu_custom_call.1} parent=1 // pred_check
      _
    $region15: #{tpu_custom_call.1} parent=1 // pred_check_branch
      %46 = sbr.rel (0) target = $region17
    $region16: #{tpu_custom_call.1} parent=1 // pred_region
      _
    $region17: #{tpu_custom_call.1} parent=1 // pred_fallthru
      _
    // Predicated region
    $region18: #{tpu_custom_call.1} parent=1 // pred_check
      _
    $region19: #{tpu_custom_call.1} parent=1 // pred_check_branch
      %48 = sbr.rel (0) target = $region21
    $region20: #{tpu_custom_call.1} parent=1 // pred_region
      _
    $region21: #{tpu_custom_call.1} parent=1 // pred_fallthru
      _
    // Predicated region
    $region22: #{tpu_custom_call.1} parent=1 // pred_check
      _
    $region23: #{tpu_custom_call.1} parent=1 // pred_check_branch
      %50 = sbr.rel (0) target = $region25
    $region24: #{tpu_custom_call.1} parent=1 // pred_region
      _
    $region25: #{tpu_custom_call.1} parent=1 // pred_fallthru
      _
    // Predicated region
    $region26: #{tpu_custom_call.1} parent=1 // pred_check
      _
    $region27: #{tpu_custom_call.1} parent=1 // pred_check_branch
      %52 = sbr.rel (0) target = $region29
    $region28: #{tpu_custom_call.1} parent=1 // pred_region
      _
    $region29: #{tpu_custom_call.1} parent=1 // pred_fallthru
      _
    // Predicated region
    $region30: #{tpu_custom_call.1} parent=1 // pred_check
      _
    $region31: #{tpu_custom_call.1} parent=1 // pred_check_branch
      %54 = sbr.rel (0) target = $region33
    $region32: #{tpu_custom_call.1} parent=1 // pred_region
      _
    $region33: #{tpu_custom_call.1} parent=1 // pred_fallthru
      _
    // Predicated region
    $region34: #{tpu_custom_call.1} parent=1 // pred_check
      _
    $region35: #{tpu_custom_call.1} parent=1 // pred_check_branch
      %56 = sbr.rel (0) target = $region37
    $region36: #{tpu_custom_call.1} parent=1 // pred_region
      %s58 = ssub.s32 8192, 8192
      %59 = vsyncadd [#allocation11], %s58
      %s60 = sshll.u32 [#allocation10], 4
      %s61 = int_to_ptr.vmem [resolvable:$true] %s60
      %66 = dma.hbm_to_vmem [thread:$0]  %s8, 8192, %s61, [#allocation11], 128, 128, 8
    $region37: #{tpu_custom_call.1} parent=1 // pred_fallthru
      _
    // Predicated region
    $region38: #{tpu_custom_call.1} parent=1 // pred_check
      _
    $region39: #{tpu_custom_call.1} parent=1 // pred_check_branch
      %68 = sbr.rel (0) target = $region41
    $region40: #{tpu_custom_call.1} parent=1 // pred_region
      _
    $region41: #{tpu_custom_call.1} parent=1 // pred_fallthru
      _
    // Predicated region
    $region42: #{tpu_custom_call.1} parent=1 // pred_check
      _
    $region43: #{tpu_custom_call.1} parent=1 // pred_check_branch
      %70 = sbr.rel (0) target = $region45
    $region44: #{tpu_custom_call.1} parent=1 // pred_region
      _
    $region45: #{tpu_custom_call.1} parent=1 // pred_fallthru
      _
    // Predicated region
    $region46: #{tpu_custom_call.1} parent=1 // pred_check
      _
    $region47: #{tpu_custom_call.1} parent=1 // pred_check_branch
      %72 = sbr.rel (0) target = $region49
    $region48: #{tpu_custom_call.1} parent=1 // pred_region
      _
    $region49: #{tpu_custom_call.1} parent=1 // pred_fallthru
      _
    // Predicated region
    $region50: #{tpu_custom_call.1} parent=1 // pred_check
      _
    $region51: #{tpu_custom_call.1} parent=1 // pred_check_branch
      %74 = sbr.rel (0) target = $region53
    $region52: #{tpu_custom_call.1} parent=1 // pred_region
      %s76 = ssub.s32 8192, 8192
      %77 = vsyncadd [#allocation11], %s76
      %s78 = sshll.u32 [#allocation12], 4
      %s79 = int_to_ptr.vmem [resolvable:$true] %s78
      %84 = dma.hbm_to_vmem [thread:$0]  %s12, 8192, %s79, [#allocation11], 128, 128, 8
    $region53: #{tpu_custom_call.1} parent=1 // pred_fallthru
      _
    // Predicated region
    $region54: #{tpu_custom_call.1} parent=1 // pred_check
      _
    $region55: #{tpu_custom_call.1} parent=1 // pred_check_branch
      %86 = sbr.rel (0) target = $region57
    $region56: #{tpu_custom_call.1} parent=1 // pred_region
      _
    $region57: #{tpu_custom_call.1} parent=1 // pred_fallthru
      _
    // Predicated region
    $region58: #{tpu_custom_call.1} parent=1 // pred_check
      _
    $region59: #{tpu_custom_call.1} parent=1 // pred_check_branch
      %88 = sbr.rel (0) target = $region61
    $region60: #{tpu_custom_call.1} parent=1 // pred_region
      _
    $region61: #{tpu_custom_call.1} parent=1 // pred_fallthru
      _
    // Predicated region
    $region62: #{tpu_custom_call.1} parent=1 // pred_check
      _
    $region63: #{tpu_custom_call.1} parent=1 // pred_check_branch
      %90 = sbr.rel (0) target = $region65
    $region64: #{tpu_custom_call.1} parent=1 // pred_region
      _
    $region65: #{tpu_custom_call.1} parent=1 // pred_fallthru
      _
    // Predicated region
    $region66: #{tpu_custom_call.1} parent=1 // pred_check
      _
    $region67: #{tpu_custom_call.1} parent=1 // pred_check_branch
      %92 = sbr.rel (0) target = $region69
    $region68: #{tpu_custom_call.1} parent=1 // pred_region
      _
    $region69: #{tpu_custom_call.1} parent=1 // pred_fallthru
      _
    // Predicated region
    $region70: #{tpu_custom_call.1} parent=1 // pred_check
      _
    $region71: #{tpu_custom_call.1} parent=1 // pred_check_branch
      %94 = sbr.rel (0) target = $region73
    $region72: #{tpu_custom_call.1} parent=1 // pred_region
      _
    $region73: #{tpu_custom_call.1} parent=1 // pred_fallthru
      _
    // Predicated region
    $region74: #{tpu_custom_call.1} parent=1 // pred_check
      _
    $region75: #{tpu_custom_call.1} parent=1 // pred_check_branch
      %96 = sbr.rel (0) target = $region77
    $region76: #{tpu_custom_call.1} parent=1 // pred_region
      _
    $region77: #{tpu_custom_call.1} parent=1 // pred_fallthru
      _
    // Predicated region
    $region78: #{tpu_custom_call.1} parent=1 // pred_check
      _
    $region79: #{tpu_custom_call.1} parent=1 // pred_check_branch
      %98 = sbr.rel (0) target = $region81
    $region80: #{tpu_custom_call.1} parent=1 // pred_region
      _
    $region81: #{tpu_custom_call.1} parent=1 // pred_fallthru
      _
    // Predicated region
    $region82: #{tpu_custom_call.1} parent=1 // pred_check
      _
    $region83: #{tpu_custom_call.1} parent=1 // pred_check_branch
      %100 = sbr.rel (0) target = $region85
    $region84: #{tpu_custom_call.1} parent=1 // pred_region
      %101 = dma.done [#allocation8], 6144
    $region85: #{tpu_custom_call.1} parent=1 // pred_fallthru
      _
    // Predicated region
    $region86: #{tpu_custom_call.1} parent=1 // pred_check
      _
    $region87: #{tpu_custom_call.1} parent=1 // pred_check_branch
      %103 = sbr.rel (0) target = $region89
    $region88: #{tpu_custom_call.1} parent=1 // pred_region
      %104 = dma.done [#allocation11], 8192
    $region89: #{tpu_custom_call.1} parent=1 // pred_fallthru
      _
    // Predicated region
    $region90: #{tpu_custom_call.1} parent=1 // pred_check
      _
    $region91: #{tpu_custom_call.1} parent=1 // pred_check_branch
      %106 = sbr.rel (0) target = $region93
    $region92: #{tpu_custom_call.1} parent=1 // pred_region
      %107 = dma.done [#allocation11], 8192
    $region93: #{tpu_custom_call.1} parent=1 // pred_fallthru
      _
    %109 = vst [vmem:[#allocation2] sm:$0x1] 0.0
    %110 = vst [vmem:[#allocation2 + $0x10] sm:$0x1] 0.0
    %111 = vst [vmem:[#allocation2 + $0x9] sm:$0x1] 0.0
    %112 = vst [vmem:[#allocation2 + $0x19] sm:$0x1] 0.0
    %113 = vst [vmem:[#allocation3] sm:$0x1] 0.0
    %114 = vst [vmem:[#allocation3 + $0x10] sm:$0x1] 0.0
    %115 = vst [vmem:[#allocation3 + $0x9] sm:$0x1] 0.0
    %116 = vst [vmem:[#allocation3 + $0x19] sm:$0x1] 0.0
    %117 = vst [vmem:[#allocation4] sm:$0x1] 0.0
    %118 = vst [vmem:[#allocation4 + $0x10] sm:$0x1] 0.0
    %119 = vst [vmem:[#allocation4 + $0x9] sm:$0x1] 0.0
    %120 = vst [vmem:[#allocation4 + $0x19] sm:$0x1] 0.0
    %v121 = vld [vmem:[%s1] sm:$0xff]
    %v122 = vld [vmem:[%s1 + $0x8] sm:$0xff]
    %123 = vst [vmem:[#allocation2 + $0x1] sm:$0xff] %v121
    %124 = vst [vmem:[#allocation2 + $0x11] sm:$0xff] %v122
    %v125 = vld [vmem:[#allocation2] sm:$0xff]
    %v126 = vld [vmem:[#allocation2 + $0x10] sm:$0xff]
    %v127 = vld [vmem:[#allocation2 + $0x2] sm:$0xff]
    %v128 = vld [vmem:[#allocation2 + $0x12] sm:$0xff]
    %v129 = vpack.c.bf16 %v126, %v125
    %v130 = vpack.c.bf16 %v122, %v121
    %v131 = vpack.c.bf16 %v128, %v127
    %v132 = vld [vmem:[#allocation7] sm:$0xff]
    %v133 = vld [vmem:[#allocation7 + $0x8] sm:$0xff]
    %v134 = vld [vmem:[#allocation7 + $0x10] sm:$0xff]
    %v135 = vld [vmem:[#allocation7 + $0x18] sm:$0xff]
    %v136 = vld [vmem:[#allocation7 + $0x20] sm:$0xff]
    %v137 = vld [vmem:[#allocation7 + $0x28] sm:$0xff]
    %v138 = vld [vmem:[#allocation7 + $0x30] sm:$0xff]
    %v139 = vld [vmem:[#allocation7 + $0x38] sm:$0xff]
    %v140 = vld [vmem:[#allocation7 + $0x40] sm:$0xff]
    %v141 = vld [vmem:[#allocation7 + $0x48] sm:$0xff]
    %v142 = vld [vmem:[#allocation7 + $0x50] sm:$0xff]
    %v143 = vld [vmem:[#allocation7 + $0x58] sm:$0xff]
    %v144 = vld [vmem:[#allocation7 + $0x60] sm:$0xff]
    %v145 = vld [vmem:[#allocation7 + $0x68] sm:$0xff]
    %v146 = vld [vmem:[#allocation7 + $0x70] sm:$0xff]
    %v147 = vld [vmem:[#allocation7 + $0x78] sm:$0xff]
    %v148 = vld [vmem:[#allocation7 + $0x80] sm:$0xff]
    %v149 = vld [vmem:[#allocation7 + $0x88] sm:$0xff]
    %v150 = vld [vmem:[#allocation7 + $0x90] sm:$0xff]
    %v151 = vld [vmem:[#allocation7 + $0x98] sm:$0xff]
    %v152 = vld [vmem:[#allocation7 + $0xa0] sm:$0xff]
    %v153 = vld [vmem:[#allocation7 + $0xa8] sm:$0xff]
    %v154 = vld [vmem:[#allocation7 + $0xb0] sm:$0xff]
    %v155 = vld [vmem:[#allocation7 + $0xb8] sm:$0xff]
    %v156 = vld [vmem:[#allocation7 + $0xc0] sm:$0xff]
    %v157 = vld [vmem:[#allocation7 + $0xc8] sm:$0xff]
    %v158 = vld [vmem:[#allocation7 + $0xd0] sm:$0xff]
    %v159 = vld [vmem:[#allocation7 + $0xd8] sm:$0xff]
    %v160 = vld [vmem:[#allocation7 + $0xe0] sm:$0xff]
    %v161 = vld [vmem:[#allocation7 + $0xe8] sm:$0xff]
    %v162 = vld [vmem:[#allocation7 + $0xf0] sm:$0xff]
    %v163 = vld [vmem:[#allocation7 + $0xf8] sm:$0xff]
    %v164 = vld [vmem:[#allocation7 + $0x100] sm:$0xff]
    %v165 = vld [vmem:[#allocation7 + $0x108] sm:$0xff]
    %v166 = vld [vmem:[#allocation7 + $0x110] sm:$0xff]
    %v167 = vld [vmem:[#allocation7 + $0x118] sm:$0xff]
    %v168 = vld [vmem:[#allocation7 + $0x120] sm:$0xff]
    %v169 = vld [vmem:[#allocation7 + $0x128] sm:$0xff]
    %v170 = vld [vmem:[#allocation7 + $0x130] sm:$0xff]
    %v171 = vld [vmem:[#allocation7 + $0x138] sm:$0xff]
    %v172 = vld [vmem:[#allocation7 + $0x140] sm:$0xff]
    %v173 = vld [vmem:[#allocation7 + $0x148] sm:$0xff]
    %v174 = vld [vmem:[#allocation7 + $0x150] sm:$0xff]
    %v175 = vld [vmem:[#allocation7 + $0x158] sm:$0xff]
    %v176 = vld [vmem:[#allocation7 + $0x160] sm:$0xff]
    %v177 = vld [vmem:[#allocation7 + $0x168] sm:$0xff]
    %v178 = vld [vmem:[#allocation7 + $0x170] sm:$0xff]
    %v179 = vld [vmem:[#allocation7 + $0x178] sm:$0xff]
    %v180 = vld [vmem:[%s3] sm:$0x3]
    %v182 = vlaneseq
    %v183 = vshrl.u32 %v182, 7
    %v184 = vsub.s32 0, %v183
    %v185 = vrot.slane %v180, %v184
    %v186 = vlaneseq
    %v187 = vshrl.u32 %v186, 7
    %v188 = vsub.s32 1, %v187
    %v189 = vrot.slane %v180, %v188
    %v240 = vunpack.c.l.b16 %v132
    %v241 = vunpack.c.h.b16 %v132
    %v242 = vunpack.c.l.b16 %v133
    %v243 = vunpack.c.h.b16 %v133
    %v244 = vunpack.c.l.b16 %v134
    %v245 = vunpack.c.h.b16 %v134
    %v246 = vunpack.c.l.b16 %v135
    %v247 = vunpack.c.h.b16 %v135
    %v248 = vunpack.c.l.b16 %v136
    %v249 = vunpack.c.h.b16 %v136
    %v250 = vunpack.c.l.b16 %v137
    %v251 = vunpack.c.h.b16 %v137
    %v252 = vunpack.c.l.b16 %v138
    %v253 = vunpack.c.h.b16 %v138
    %v254 = vunpack.c.l.b16 %v139
    %v255 = vunpack.c.h.b16 %v139
    %v256 = vunpack.c.l.b16 %v140
    %v257 = vunpack.c.h.b16 %v140
    %v258 = vunpack.c.l.b16 %v141
    %v259 = vunpack.c.h.b16 %v141
    %v260 = vunpack.c.l.b16 %v142
    %v261 = vunpack.c.h.b16 %v142
    %v262 = vunpack.c.l.b16 %v143
    %v263 = vunpack.c.h.b16 %v143
    %v264 = vunpack.c.l.b16 %v144
    %v265 = vunpack.c.h.b16 %v144
    %v266 = vunpack.c.l.b16 %v145
    %v267 = vunpack.c.h.b16 %v145
    %v268 = vunpack.c.l.b16 %v146
    %v269 = vunpack.c.h.b16 %v146
    %v270 = vunpack.c.l.b16 %v147
    %v271 = vunpack.c.h.b16 %v147
    %v272 = vunpack.c.l.b16 %v148
    %v273 = vunpack.c.h.b16 %v148
    %v274 = vunpack.c.l.b16 %v149
    %v275 = vunpack.c.h.b16 %v149
    %v276 = vunpack.c.l.b16 %v150
    %v277 = vunpack.c.h.b16 %v150
    %v278 = vunpack.c.l.b16 %v151
    %v279 = vunpack.c.h.b16 %v151
    %v280 = vunpack.c.l.b16 %v152
    %v281 = vunpack.c.h.b16 %v152
    %v282 = vunpack.c.l.b16 %v153
    %v283 = vunpack.c.h.b16 %v153
    %v284 = vunpack.c.l.b16 %v154
    %v285 = vunpack.c.h.b16 %v154
    %v286 = vunpack.c.l.b16 %v155
    %v287 = vunpack.c.h.b16 %v155
    %v288 = vunpack.c.l.b16 %v156
    %v289 = vunpack.c.h.b16 %v156
    %v290 = vunpack.c.l.b16 %v157
    %v291 = vunpack.c.h.b16 %v157
    %v292 = vunpack.c.l.b16 %v158
    %v293 = vunpack.c.h.b16 %v158
    %v294 = vunpack.c.l.b16 %v159
    %v295 = vunpack.c.h.b16 %v159
    %v296 = vunpack.c.l.b16 %v160
    %v297 = vunpack.c.h.b16 %v160
    %v298 = vunpack.c.l.b16 %v161
    %v299 = vunpack.c.h.b16 %v161
    %v300 = vunpack.c.l.b16 %v162
    %v301 = vunpack.c.h.b16 %v162
    %v302 = vunpack.c.l.b16 %v163
    %v303 = vunpack.c.h.b16 %v163
    %v304 = vunpack.c.l.b16 %v164
    %v305 = vunpack.c.h.b16 %v164
    %v306 = vunpack.c.l.b16 %v165
    %v307 = vunpack.c.h.b16 %v165
    %v308 = vunpack.c.l.b16 %v166
    %v309 = vunpack.c.h.b16 %v166
    %v310 = vunpack.c.l.b16 %v167
    %v311 = vunpack.c.h.b16 %v167
    %v312 = vunpack.c.l.b16 %v168
    %v313 = vunpack.c.h.b16 %v168
    %v314 = vunpack.c.l.b16 %v169
    %v315 = vunpack.c.h.b16 %v169
    %v316 = vunpack.c.l.b16 %v170
    %v317 = vunpack.c.h.b16 %v170
    %v318 = vunpack.c.l.b16 %v171
    %v319 = vunpack.c.h.b16 %v171
    %v320 = vunpack.c.l.b16 %v172
    %v321 = vunpack.c.h.b16 %v172
    %v322 = vunpack.c.l.b16 %v173
    %v323 = vunpack.c.h.b16 %v173
    %v324 = vunpack.c.l.b16 %v174
    %v325 = vunpack.c.h.b16 %v174
    %v326 = vunpack.c.l.b16 %v175
    %v327 = vunpack.c.h.b16 %v175
    %v328 = vunpack.c.l.b16 %v176
    %v329 = vunpack.c.h.b16 %v176
    %v330 = vunpack.c.l.b16 %v177
    %v331 = vunpack.c.h.b16 %v177
    %v332 = vunpack.c.l.b16 %v178
    %v333 = vunpack.c.h.b16 %v178
    %v334 = vunpack.c.l.b16 %v179
    %v335 = vunpack.c.h.b16 %v179
    %v336 = vpack.c.b16 %v242, %v240
    %v337 = vpack.c.b16 %v243, %v241
    %v338 = vpack.c.b16 %v246, %v244
    %v339 = vpack.c.b16 %v247, %v245
    %v340 = vpack.c.b16 %v250, %v248
    %v341 = vpack.c.b16 %v251, %v249
    %v342 = vpack.c.b16 %v254, %v252
    %v343 = vpack.c.b16 %v255, %v253
    %v344 = vpack.c.b16 %v258, %v256
    %v345 = vpack.c.b16 %v259, %v257
    %v346 = vpack.c.b16 %v262, %v260
    %v347 = vpack.c.b16 %v263, %v261
    %v348 = vpack.c.b16 %v266, %v264
    %v349 = vpack.c.b16 %v267, %v265
    %v350 = vpack.c.b16 %v270, %v268
    %v351 = vpack.c.b16 %v271, %v269
    %v352 = vpack.c.b16 %v274, %v272
    %v353 = vpack.c.b16 %v275, %v273
    %v354 = vpack.c.b16 %v278, %v276
    %v355 = vpack.c.b16 %v279, %v277
    %v356 = vpack.c.b16 %v282, %v280
    %v357 = vpack.c.b16 %v283, %v281
    %v358 = vpack.c.b16 %v286, %v284
    %v359 = vpack.c.b16 %v287, %v285
    %v360 = vpack.c.b16 %v290, %v288
    %v361 = vpack.c.b16 %v291, %v289
    %v362 = vpack.c.b16 %v294, %v292
    %v363 = vpack.c.b16 %v295, %v293
    %v364 = vpack.c.b16 %v298, %v296
    %v365 = vpack.c.b16 %v299, %v297
    %v366 = vpack.c.b16 %v302, %v300
    %v367 = vpack.c.b16 %v303, %v301
    %v368 = vpack.c.b16 %v306, %v304
    %v369 = vpack.c.b16 %v307, %v305
    %v370 = vpack.c.b16 %v310, %v308
    %v371 = vpack.c.b16 %v311, %v309
    %v372 = vpack.c.b16 %v314, %v312
    %v373 = vpack.c.b16 %v315, %v313
    %v374 = vpack.c.b16 %v318, %v316
    %v375 = vpack.c.b16 %v319, %v317
    %v376 = vpack.c.b16 %v322, %v320
    %v377 = vpack.c.b16 %v323, %v321
    %v378 = vpack.c.b16 %v326, %v324
    %v379 = vpack.c.b16 %v327, %v325
    %v380 = vpack.c.b16 %v330, %v328
    %v381 = vpack.c.b16 %v331, %v329
    %v382 = vpack.c.b16 %v334, %v332
    %v383 = vpack.c.b16 %v335, %v333
    %432 = vmatprep.subr.bf16.mxu0 %v337
    %433 = vmatpush1.bf16.msra.mxu0 %v336
    %434 = vmatprep.subr.bf16.mxu0 %v339
    %435 = vmatpush1.bf16.msra.mxu0 %v338
    %436 = vmatprep.subr.bf16.mxu0 %v341
    %437 = vmatpush1.bf16.msra.mxu0 %v340
    %438 = vmatprep.subr.bf16.mxu0 %v343
    %439 = vmatpush1.bf16.msra.mxu0 %v342
    %440 = vmatprep.subr.bf16.mxu0 %v345
    %441 = vmatpush1.bf16.msra.mxu0 %v344
    %442 = vmatprep.subr.bf16.mxu0 %v347
    %443 = vmatpush1.bf16.msra.mxu0 %v346
    %444 = vmatprep.subr.bf16.mxu0 %v349
    %445 = vmatpush1.bf16.msra.mxu0 %v348
    %446 = vmatprep.subr.bf16.mxu0 %v351
    %447 = vmatpush1.bf16.msra.mxu0 %v350
    %448 = vmatprep.subr.bf16.mxu0 %v353
    %449 = vmatpush1.bf16.msra.mxu0 %v352
    %450 = vmatprep.subr.bf16.mxu0 %v355
    %451 = vmatpush1.bf16.msra.mxu0 %v354
    %452 = vmatprep.subr.bf16.mxu0 %v357
    %453 = vmatpush1.bf16.msra.mxu0 %v356
    %454 = vmatprep.subr.bf16.mxu0 %v359
    %455 = vmatpush1.bf16.msra.mxu0 %v358
    %456 = vmatprep.subr.bf16.mxu0 %v361
    %457 = vmatpush1.bf16.msra.mxu0 %v360
    %458 = vmatprep.subr.bf16.mxu0 %v363
    %459 = vmatpush1.bf16.msra.mxu0 %v362
    %460 = vmatprep.subr.bf16.mxu0 %v365
    %461 = vmatpush1.bf16.msra.mxu0 %v364
    %462 = vmatprep.subr.bf16.mxu0 %v367
    %463 = vmatpush1.bf16.msra.mxu0 %v366
    %464 = vmatprep.mubr.bf16.mxu0 %v130
    %465 = vmatmul.mubr.bf16.gmra.mrb[0].mxu0 %v129
    %v466 = vpop.f32.mrb[0].mxu0
    %v467 = vadd.f32 %v185, %v466
    %v468 = vpop.f32.mrb[0].mxu0
    %v469 = vadd.f32 %v189, %v468
    %v470 = vpop.f32.mrb[0].mxu0
    %v471 = vadd.f32 %v185, %v470
    %v472 = vpop.f32.mrb[0].mxu0
    %v473 = vadd.f32 %v189, %v472
    %474 = vdwg.mxu0
    %475 = vmatprep.subr.bf16.mxu0 %v369
    %476 = vmatpush1.bf16.msra.mxu0 %v368
    %477 = vmatprep.subr.bf16.mxu0 %v371
    %478 = vmatpush1.bf16.msra.mxu0 %v370
    %479 = vmatprep.subr.bf16.mxu0 %v373
    %480 = vmatpush1.bf16.msra.mxu0 %v372
    %481 = vmatprep.subr.bf16.mxu0 %v375
    %482 = vmatpush1.bf16.msra.mxu0 %v374
    %483 = vmatprep.subr.bf16.mxu0 %v377
    %484 = vmatpush1.bf16.msra.mxu0 %v376
    %485 = vmatprep.subr.bf16.mxu0 %v379
    %486 = vmatpush1.bf16.msra.mxu0 %v378
    %487 = vmatprep.subr.bf16.mxu0 %v381
    %488 = vmatpush1.bf16.msra.mxu0 %v380
    %489 = vmatprep.subr.bf16.mxu0 %v383
    %490 = vmatpush1.bf16.msra.mxu0 %v382
    %491 = vmatprep.subr.bf16.mxu0 0
    %492 = vmatpush1.bf16.msra.mxu0 0
    %493 = vmatprep.subr.bf16.mxu0 0
    %494 = vmatpush1.bf16.msra.mxu0 0
    %495 = vmatprep.subr.bf16.mxu0 0
    %496 = vmatpush1.bf16.msra.mxu0 0
    %497 = vmatprep.subr.bf16.mxu0 0
    %498 = vmatpush1.bf16.msra.mxu0 0
    %499 = vmatprep.subr.bf16.mxu0 0
    %500 = vmatpush1.bf16.msra.mxu0 0
    %501 = vmatprep.subr.bf16.mxu0 0
    %502 = vmatpush1.bf16.msra.mxu0 0
    %503 = vmatprep.subr.bf16.mxu0 0
    %504 = vmatpush1.bf16.msra.mxu0 0
    %505 = vmatprep.subr.bf16.mxu0 0
    %506 = vmatpush1.bf16.msra.mxu0 0
    %507 = vmatprep.mubr.bf16.mxu0 0
    %508 = vmatmul.mubr.bf16.gmra.mrb[0].mxu0 %v131
    %v509 = vpop.f32.mrb[0].mxu0
    %v510 = vadd.f32 %v467, %v509
    %v511 = vpop.f32.mrb[0].mxu0
    %v512 = vadd.f32 %v469, %v511
    %v513 = vpop.f32.mrb[0].mxu0
    %v514 = vadd.f32 %v471, %v513
    %v515 = vpop.f32.mrb[0].mxu0
    %v516 = vadd.f32 %v473, %v515
    %517 = vdwg.mxu0
    %vm518 = vcmp.ge.f32.partialorder %v510, 0.0
    %vm519 = vcmp.ge.f32.partialorder %v512, 0.0
    %vm520 = vcmp.ge.f32.partialorder %v514, 0.0
    %vm521 = vcmp.ge.f32.partialorder %v516, 0.0
    %v522 = vmul.f32 %v510, 0.2
    %v523 = vmul.f32 %v512, 0.2
    %v524 = vmul.f32 %v514, 0.2
    %v525 = vmul.f32 %v516, 0.2
    %v526 = vsel %vm518, %v510, %v522
    %v527 = vsel %vm519, %v512, %v523
    %v528 = vsel %vm520, %v514, %v524
    %v529 = vsel %vm521, %v516, %v525
    %v530 = vld [vmem:[%s4] sm:$0x1]
    %v531 = vld [vmem:[%s5] sm:$0x1]
    %v532 = vadd.f32 %v526, %v528
    %v533 = vrot.slane %v532, 4
    %v534 = vadd.f32 %v532, %v533
    %v535 = vrot.slane %v534, 2
    %v536 = vadd.f32 %v534, %v535
    %v537 = vrot.slane %v536, 1
    %v538 = vadd.f32 %v536, %v537
    %v539 = vadd.f32 %v527, %v529
    %v540 = vrot.slane %v539, 4
    %v541 = vadd.f32 %v539, %v540
    %v542 = vrot.slane %v541, 2
    %v543 = vadd.f32 %v541, %v542
    %v544 = vrot.slane %v543, 1
    %v545 = vadd.f32 %v543, %v544
    %v546 = vadd.f32 %v538, %v545
    %v547 = vrcp.pop 32.0
    %v548 = vmul.f32 %v546, %v547
    %v549 = vsub.f32 %v526, %v548
    %v550 = vsub.f32 %v528, %v548
    %v551 = vsub.f32 %v527, %v548
    %v552 = vsub.f32 %v529, %v548
    %v553 = vmul.f32 %v549, %v549
    %v554 = vmul.f32 %v550, %v550
    %v555 = vadd.f32 %v553, %v554
    %v556 = vrot.slane %v555, 4
    %v557 = vadd.f32 %v555, %v556
    %v558 = vrot.slane %v557, 2
    %v559 = vadd.f32 %v557, %v558
    %v560 = vrot.slane %v559, 1
    %v561 = vadd.f32 %v559, %v560
    %v562 = vmul.f32 %v551, %v551
    %v563 = vmul.f32 %v552, %v552
    %v564 = vadd.f32 %v562, %v563
    %v565 = vrot.slane %v564, 4
    %v566 = vadd.f32 %v564, %v565
    %v567 = vrot.slane %v566, 2
    %v568 = vadd.f32 %v566, %v567
    %v569 = vrot.slane %v568, 1
    %v570 = vadd.f32 %v568, %v569
    %v571 = vadd.f32 %v561, %v570
    %v572 = vmul.f32 %v571, %v547
    %v573 = vadd.f32 %v572, 1e-05
    %v574 = vrsqrt.pop %v573
    %v575 = vmul.f32 %v574, %v530
    %v576 = vlaneseq
    %v577 = vshrl.u32 %v576, 7
    %v578 = vsub.s32 0, %v577
    %v579 = vrot.slane %v575, %v578
    %v580 = vmul.f32 %v549, %v579
    %v581 = vmul.f32 %v550, %v579
    %v583 = vlaneseq
    %v584 = vshrl.u32 %v583, 7
    %v585 = vsub.s32 0, %v584
    %v586 = vrot.slane %v531, %v585
    %v588 = vadd.f32 %v580, %v586
    %v589 = vadd.f32 %v581, %v586
    %v590 = vmul.f32 %v551, %v579
    %v591 = vmul.f32 %v552, %v579
    %v592 = vadd.f32 %v590, %v586
    %v593 = vadd.f32 %v591, %v586
    %v594 = vld [vmem:[%s6] sm:$0x1]
    %v595 = vld [vmem:[%s7] sm:$0x1]
    %v596 = vadd.f32 %v588, %v589
    %v597 = vrot.slane %v596, 4
    %v598 = vadd.f32 %v596, %v597
    %v599 = vrot.slane %v598, 2
    %v600 = vadd.f32 %v598, %v599
    %v601 = vrot.slane %v600, 1
    %v602 = vadd.f32 %v600, %v601
    %v603 = vadd.f32 %v592, %v593
    %v604 = vrot.slane %v603, 4
    %v605 = vadd.f32 %v603, %v604
    %v606 = vrot.slane %v605, 2
    %v607 = vadd.f32 %v605, %v606
    %v608 = vrot.slane %v607, 1
    %v609 = vadd.f32 %v607, %v608
    %v610 = vadd.f32 %v602, %v609
    %v611 = vmul.f32 %v610, %v547
    %v612 = vsub.f32 %v588, %v611
    %v613 = vsub.f32 %v589, %v611
    %v614 = vsub.f32 %v592, %v611
    %v615 = vsub.f32 %v593, %v611
    %v616 = vmul.f32 %v612, %v612
    %v617 = vmul.f32 %v613, %v613
    %v618 = vadd.f32 %v616, %v617
    %v619 = vrot.slane %v618, 4
    %v620 = vadd.f32 %v618, %v619
    %v621 = vrot.slane %v620, 2
    %v622 = vadd.f32 %v620, %v621
    %v623 = vrot.slane %v622, 1
    %v624 = vadd.f32 %v622, %v623
    %v625 = vmul.f32 %v614, %v614
    %v626 = vmul.f32 %v615, %v615
    %v627 = vadd.f32 %v625, %v626
    %v628 = vrot.slane %v627, 4
    %v629 = vadd.f32 %v627, %v628
    %v630 = vrot.slane %v629, 2
    %v631 = vadd.f32 %v629, %v630
    %v632 = vrot.slane %v631, 1
    %v633 = vadd.f32 %v631, %v632
    %v634 = vadd.f32 %v624, %v633
    %v635 = vmul.f32 %v634, %v547
    %v636 = vadd.f32 %v635, 1e-05
    %v637 = vrsqrt.pop %v636
    %v638 = vmul.f32 %v637, %v594
    %v639 = vlaneseq
    %v640 = vshrl.u32 %v639, 7
    %v641 = vsub.s32 0, %v640
    %v642 = vrot.slane %v638, %v641
    %v643 = vmul.f32 %v612, %v642
    %v644 = vmul.f32 %v613, %v642
    %v646 = vlaneseq
    %v647 = vshrl.u32 %v646, 7
    %v648 = vsub.s32 0, %v647
    %v649 = vrot.slane %v595, %v648
    %v651 = vadd.f32 %v643, %v649
    %v652 = vadd.f32 %v644, %v649
    %v653 = vmul.f32 %v614, %v642
    %v654 = vmul.f32 %v615, %v642
    %v655 = vadd.f32 %v653, %v649
    %v656 = vadd.f32 %v654, %v649
    %vm657 = vcmp.ge.f32.partialorder %v651, 0.0
    %vm658 = vcmp.ge.f32.partialorder %v652, 0.0
    %v659 = vmul.f32 %v651, 0.2
    %v660 = vmul.f32 %v652, 0.2
    %v661 = vsel %vm657, %v651, %v659
    %v662 = vsel %vm658, %v652, %v660
    %vm663 = vcmp.ge.f32.partialorder %v655, 0.0
    %vm664 = vcmp.ge.f32.partialorder %v656, 0.0
    %v665 = vmul.f32 %v655, 0.2
    %v666 = vmul.f32 %v656, 0.2
    %v667 = vsel %vm663, %v655, %v665
    %v668 = vsel %vm664, %v656, %v666
    %v669 = vld [vmem:[#allocation10] sm:$0xff]
    %v670 = vld [vmem:[#allocation10 + $0x8] sm:$0xff]
    %v671 = vld [vmem:[#allocation10 + $0x10] sm:$0xff]
    %v672 = vld [vmem:[#allocation10 + $0x18] sm:$0xff]
    %v673 = vld [vmem:[#allocation10 + $0x20] sm:$0xff]
    %v674 = vld [vmem:[#allocation10 + $0x28] sm:$0xff]
    %v675 = vld [vmem:[#allocation10 + $0x30] sm:$0xff]
    %v676 = vld [vmem:[#allocation10 + $0x38] sm:$0xff]
    %v677 = vld [vmem:[#allocation10 + $0x40] sm:$0xff]
    %v678 = vld [vmem:[#allocation10 + $0x48] sm:$0xff]
    %v679 = vld [vmem:[#allocation10 + $0x50] sm:$0xff]
    %v680 = vld [vmem:[#allocation10 + $0x58] sm:$0xff]
    %v681 = vld [vmem:[#allocation10 + $0x60] sm:$0xff]
    %v682 = vld [vmem:[#allocation10 + $0x68] sm:$0xff]
    %v683 = vld [vmem:[#allocation10 + $0x70] sm:$0xff]
    %v684 = vld [vmem:[#allocation10 + $0x78] sm:$0xff]
    %v685 = vld [vmem:[#allocation10 + $0x80] sm:$0xff]
    %v686 = vld [vmem:[#allocation10 + $0x88] sm:$0xff]
    %v687 = vld [vmem:[#allocation10 + $0x90] sm:$0xff]
    %v688 = vld [vmem:[#allocation10 + $0x98] sm:$0xff]
    %v689 = vld [vmem:[#allocation10 + $0xa0] sm:$0xff]
    %v690 = vld [vmem:[#allocation10 + $0xa8] sm:$0xff]
    %v691 = vld [vmem:[#allocation10 + $0xb0] sm:$0xff]
    %v692 = vld [vmem:[#allocation10 + $0xb8] sm:$0xff]
    %v693 = vld [vmem:[#allocation10 + $0xc0] sm:$0xff]
    %v694 = vld [vmem:[#allocation10 + $0xc8] sm:$0xff]
    %v695 = vld [vmem:[#allocation10 + $0xd0] sm:$0xff]
    %v696 = vld [vmem:[#allocation10 + $0xd8] sm:$0xff]
    %v697 = vld [vmem:[#allocation10 + $0xe0] sm:$0xff]
    %v698 = vld [vmem:[#allocation10 + $0xe8] sm:$0xff]
    %v699 = vld [vmem:[#allocation10 + $0xf0] sm:$0xff]
    %v700 = vld [vmem:[#allocation10 + $0xf8] sm:$0xff]
    %v701 = vld [vmem:[#allocation10 + $0x100] sm:$0xff]
    %v702 = vld [vmem:[#allocation10 + $0x108] sm:$0xff]
    %v703 = vld [vmem:[#allocation10 + $0x110] sm:$0xff]
    %v704 = vld [vmem:[#allocation10 + $0x118] sm:$0xff]
    %v705 = vld [vmem:[#allocation10 + $0x120] sm:$0xff]
    %v706 = vld [vmem:[#allocation10 + $0x128] sm:$0xff]
    %v707 = vld [vmem:[#allocation10 + $0x130] sm:$0xff]
    %v708 = vld [vmem:[#allocation10 + $0x138] sm:$0xff]
    %v709 = vld [vmem:[#allocation10 + $0x140] sm:$0xff]
    %v710 = vld [vmem:[#allocation10 + $0x148] sm:$0xff]
    %v711 = vld [vmem:[#allocation10 + $0x150] sm:$0xff]
    %v712 = vld [vmem:[#allocation10 + $0x158] sm:$0xff]
    %v713 = vld [vmem:[#allocation10 + $0x160] sm:$0xff]
    %v714 = vld [vmem:[#allocation10 + $0x168] sm:$0xff]
    %v715 = vld [vmem:[#allocation10 + $0x170] sm:$0xff]
    %v716 = vld [vmem:[#allocation10 + $0x178] sm:$0xff]
    %v717 = vld [vmem:[#allocation10 + $0x180] sm:$0xff]
    %v718 = vld [vmem:[#allocation10 + $0x188] sm:$0xff]
    %v719 = vld [vmem:[#allocation10 + $0x190] sm:$0xff]
    %v720 = vld [vmem:[#allocation10 + $0x198] sm:$0xff]
    %v721 = vld [vmem:[#allocation10 + $0x1a0] sm:$0xff]
    %v722 = vld [vmem:[#allocation10 + $0x1a8] sm:$0xff]
    %v723 = vld [vmem:[#allocation10 + $0x1b0] sm:$0xff]
    %v724 = vld [vmem:[#allocation10 + $0x1b8] sm:$0xff]
    %v725 = vld [vmem:[#allocation10 + $0x1c0] sm:$0xff]
    %v726 = vld [vmem:[#allocation10 + $0x1c8] sm:$0xff]
    %v727 = vld [vmem:[#allocation10 + $0x1d0] sm:$0xff]
    %v728 = vld [vmem:[#allocation10 + $0x1d8] sm:$0xff]
    %v729 = vld [vmem:[#allocation10 + $0x1e0] sm:$0xff]
    %v730 = vld [vmem:[#allocation10 + $0x1e8] sm:$0xff]
    %v731 = vld [vmem:[#allocation10 + $0x1f0] sm:$0xff]
    %v732 = vld [vmem:[#allocation10 + $0x1f8] sm:$0xff]
    %v733 = vld [vmem:[%s9] sm:$0x3]
    %734 = vst [vmem:[#allocation4 + $0x1] sm:$0xff] %v667
    %735 = vst [vmem:[#allocation4 + $0x11] sm:$0xff] %v668
    %736 = vst [vmem:[#allocation3 + $0x1] sm:$0xff] %v661
    %737 = vst [vmem:[#allocation3 + $0x11] sm:$0xff] %v662
    %v738 = vld [vmem:[#allocation4] sm:$0xff]
    %v739 = vld [vmem:[#allocation4 + $0x10] sm:$0xff]
    %v740 = vld [vmem:[#allocation3 + $0x2] sm:$0xff]
    %v741 = vld [vmem:[#allocation3 + $0x12] sm:$0xff]
    %v742 = vpack.c.bf16 %v739, %v738
    %v743 = vpack.c.bf16 %v662, %v661
    %v744 = vpack.c.bf16 %v668, %v667
    %v745 = vpack.c.bf16 %v741, %v740
    %v747 = vlaneseq
    %v748 = vshrl.u32 %v747, 7
    %v749 = vsub.s32 0, %v748
    %v750 = vrot.slane %v733, %v749
    %v751 = vlaneseq
    %v752 = vshrl.u32 %v751, 7
    %v753 = vsub.s32 1, %v752
    %v754 = vrot.slane %v733, %v753
    %v821 = vunpack.c.l.b16 %v669
    %v822 = vunpack.c.h.b16 %v669
    %v823 = vunpack.c.l.b16 %v670
    %v824 = vunpack.c.h.b16 %v670
    %v825 = vunpack.c.l.b16 %v671
    %v826 = vunpack.c.h.b16 %v671
    %v827 = vunpack.c.l.b16 %v672
    %v828 = vunpack.c.h.b16 %v672
    %v829 = vunpack.c.l.b16 %v673
    %v830 = vunpack.c.h.b16 %v673
    %v831 = vunpack.c.l.b16 %v674
    %v832 = vunpack.c.h.b16 %v674
    %v833 = vunpack.c.l.b16 %v675
    %v834 = vunpack.c.h.b16 %v675
    %v835 = vunpack.c.l.b16 %v676
    %v836 = vunpack.c.h.b16 %v676
    %v837 = vunpack.c.l.b16 %v677
    %v838 = vunpack.c.h.b16 %v677
    %v839 = vunpack.c.l.b16 %v678
    %v840 = vunpack.c.h.b16 %v678
    %v841 = vunpack.c.l.b16 %v679
    %v842 = vunpack.c.h.b16 %v679
    %v843 = vunpack.c.l.b16 %v680
    %v844 = vunpack.c.h.b16 %v680
    %v845 = vunpack.c.l.b16 %v681
    %v846 = vunpack.c.h.b16 %v681
    %v847 = vunpack.c.l.b16 %v682
    %v848 = vunpack.c.h.b16 %v682
    %v849 = vunpack.c.l.b16 %v683
    %v850 = vunpack.c.h.b16 %v683
    %v851 = vunpack.c.l.b16 %v684
    %v852 = vunpack.c.h.b16 %v684
    %v853 = vunpack.c.l.b16 %v685
    %v854 = vunpack.c.h.b16 %v685
    %v855 = vunpack.c.l.b16 %v686
    %v856 = vunpack.c.h.b16 %v686
    %v857 = vunpack.c.l.b16 %v687
    %v858 = vunpack.c.h.b16 %v687
    %v859 = vunpack.c.l.b16 %v688
    %v860 = vunpack.c.h.b16 %v688
    %v861 = vunpack.c.l.b16 %v689
    %v862 = vunpack.c.h.b16 %v689
    %v863 = vunpack.c.l.b16 %v690
    %v864 = vunpack.c.h.b16 %v690
    %v865 = vunpack.c.l.b16 %v691
    %v866 = vunpack.c.h.b16 %v691
    %v867 = vunpack.c.l.b16 %v692
    %v868 = vunpack.c.h.b16 %v692
    %v869 = vunpack.c.l.b16 %v693
    %v870 = vunpack.c.h.b16 %v693
    %v871 = vunpack.c.l.b16 %v694
    %v872 = vunpack.c.h.b16 %v694
    %v873 = vunpack.c.l.b16 %v695
    %v874 = vunpack.c.h.b16 %v695
    %v875 = vunpack.c.l.b16 %v696
    %v876 = vunpack.c.h.b16 %v696
    %v877 = vunpack.c.l.b16 %v697
    %v878 = vunpack.c.h.b16 %v697
    %v879 = vunpack.c.l.b16 %v698
    %v880 = vunpack.c.h.b16 %v698
    %v881 = vunpack.c.l.b16 %v699
    %v882 = vunpack.c.h.b16 %v699
    %v883 = vunpack.c.l.b16 %v700
    %v884 = vunpack.c.h.b16 %v700
    %v885 = vunpack.c.l.b16 %v701
    %v886 = vunpack.c.h.b16 %v701
    %v887 = vunpack.c.l.b16 %v702
    %v888 = vunpack.c.h.b16 %v702
    %v889 = vunpack.c.l.b16 %v703
    %v890 = vunpack.c.h.b16 %v703
    %v891 = vunpack.c.l.b16 %v704
    %v892 = vunpack.c.h.b16 %v704
    %v893 = vunpack.c.l.b16 %v705
    %v894 = vunpack.c.h.b16 %v705
    %v895 = vunpack.c.l.b16 %v706
    %v896 = vunpack.c.h.b16 %v706
    %v897 = vunpack.c.l.b16 %v707
    %v898 = vunpack.c.h.b16 %v707
    %v899 = vunpack.c.l.b16 %v708
    %v900 = vunpack.c.h.b16 %v708
    %v901 = vunpack.c.l.b16 %v709
    %v902 = vunpack.c.h.b16 %v709
    %v903 = vunpack.c.l.b16 %v710
    %v904 = vunpack.c.h.b16 %v710
    %v905 = vunpack.c.l.b16 %v711
    %v906 = vunpack.c.h.b16 %v711
    %v907 = vunpack.c.l.b16 %v712
    %v908 = vunpack.c.h.b16 %v712
    %v909 = vunpack.c.l.b16 %v713
    %v910 = vunpack.c.h.b16 %v713
    %v911 = vunpack.c.l.b16 %v714
    %v912 = vunpack.c.h.b16 %v714
    %v913 = vunpack.c.l.b16 %v715
    %v914 = vunpack.c.h.b16 %v715
    %v915 = vunpack.c.l.b16 %v716
    %v916 = vunpack.c.h.b16 %v716
    %v917 = vunpack.c.l.b16 %v717
    %v918 = vunpack.c.h.b16 %v717
    %v919 = vunpack.c.l.b16 %v718
    %v920 = vunpack.c.h.b16 %v718
    %v921 = vunpack.c.l.b16 %v719
    %v922 = vunpack.c.h.b16 %v719
    %v923 = vunpack.c.l.b16 %v720
    %v924 = vunpack.c.h.b16 %v720
    %v925 = vunpack.c.l.b16 %v721
    %v926 = vunpack.c.h.b16 %v721
    %v927 = vunpack.c.l.b16 %v722
    %v928 = vunpack.c.h.b16 %v722
    %v929 = vunpack.c.l.b16 %v723
    %v930 = vunpack.c.h.b16 %v723
    %v931 = vunpack.c.l.b16 %v724
    %v932 = vunpack.c.h.b16 %v724
    %v933 = vunpack.c.l.b16 %v725
    %v934 = vunpack.c.h.b16 %v725
    %v935 = vunpack.c.l.b16 %v726
    %v936 = vunpack.c.h.b16 %v726
    %v937 = vunpack.c.l.b16 %v727
    %v938 = vunpack.c.h.b16 %v727
    %v939 = vunpack.c.l.b16 %v728
    %v940 = vunpack.c.h.b16 %v728
    %v941 = vunpack.c.l.b16 %v729
    %v942 = vunpack.c.h.b16 %v729
    %v943 = vunpack.c.l.b16 %v730
    %v944 = vunpack.c.h.b16 %v730
    %v945 = vunpack.c.l.b16 %v731
    %v946 = vunpack.c.h.b16 %v731
    %v947 = vunpack.c.l.b16 %v732
    %v948 = vunpack.c.h.b16 %v732
    %v949 = vpack.c.b16 %v823, %v821
    %v950 = vpack.c.b16 %v824, %v822
    %v951 = vpack.c.b16 %v827, %v825
    %v952 = vpack.c.b16 %v828, %v826
    %v953 = vpack.c.b16 %v831, %v829
    %v954 = vpack.c.b16 %v832, %v830
    %v955 = vpack.c.b16 %v835, %v833
    %v956 = vpack.c.b16 %v836, %v834
    %v957 = vpack.c.b16 %v839, %v837
    %v958 = vpack.c.b16 %v840, %v838
    %v959 = vpack.c.b16 %v843, %v841
    %v960 = vpack.c.b16 %v844, %v842
    %v961 = vpack.c.b16 %v847, %v845
    %v962 = vpack.c.b16 %v848, %v846
    %v963 = vpack.c.b16 %v851, %v849
    %v964 = vpack.c.b16 %v852, %v850
    %v965 = vpack.c.b16 %v855, %v853
    %v966 = vpack.c.b16 %v856, %v854
    %v967 = vpack.c.b16 %v859, %v857
    %v968 = vpack.c.b16 %v860, %v858
    %v969 = vpack.c.b16 %v863, %v861
    %v970 = vpack.c.b16 %v864, %v862
    %v971 = vpack.c.b16 %v867, %v865
    %v972 = vpack.c.b16 %v868, %v866
    %v973 = vpack.c.b16 %v871, %v869
    %v974 = vpack.c.b16 %v872, %v870
    %v975 = vpack.c.b16 %v875, %v873
    %v976 = vpack.c.b16 %v876, %v874
    %v977 = vpack.c.b16 %v879, %v877
    %v978 = vpack.c.b16 %v880, %v878
    %v979 = vpack.c.b16 %v883, %v881
    %v980 = vpack.c.b16 %v884, %v882
    %v981 = vpack.c.b16 %v887, %v885
    %v982 = vpack.c.b16 %v888, %v886
    %v983 = vpack.c.b16 %v891, %v889
    %v984 = vpack.c.b16 %v892, %v890
    %v985 = vpack.c.b16 %v895, %v893
    %v986 = vpack.c.b16 %v896, %v894
    %v987 = vpack.c.b16 %v899, %v897
    %v988 = vpack.c.b16 %v900, %v898
    %v989 = vpack.c.b16 %v903, %v901
    %v990 = vpack.c.b16 %v904, %v902
    %v991 = vpack.c.b16 %v907, %v905
    %v992 = vpack.c.b16 %v908, %v906
    %v993 = vpack.c.b16 %v911, %v909
    %v994 = vpack.c.b16 %v912, %v910
    %v995 = vpack.c.b16 %v915, %v913
    %v996 = vpack.c.b16 %v916, %v914
    %v997 = vpack.c.b16 %v919, %v917
    %v998 = vpack.c.b16 %v920, %v918
    %v999 = vpack.c.b16 %v923, %v921
    %v1000 = vpack.c.b16 %v924, %v922
    %v1001 = vpack.c.b16 %v927, %v925
    %v1002 = vpack.c.b16 %v928, %v926
    %v1003 = vpack.c.b16 %v931, %v929
    %v1004 = vpack.c.b16 %v932, %v930
    %v1005 = vpack.c.b16 %v935, %v933
    %v1006 = vpack.c.b16 %v936, %v934
    %v1007 = vpack.c.b16 %v939, %v937
    %v1008 = vpack.c.b16 %v940, %v938
    %v1009 = vpack.c.b16 %v943, %v941
    %v1010 = vpack.c.b16 %v944, %v942
    %v1011 = vpack.c.b16 %v947, %v945
    %v1012 = vpack.c.b16 %v948, %v946
    %1077 = vmatprep.subr.bf16.mxu0 %v950
    %1078 = vmatpush1.bf16.msra.mxu0 %v949
    %1079 = vmatprep.subr.bf16.mxu0 %v952
    %1080 = vmatpush1.bf16.msra.mxu0 %v951
    %1081 = vmatprep.subr.bf16.mxu0 %v954
    %1082 = vmatpush1.bf16.msra.mxu0 %v953
    %1083 = vmatprep.subr.bf16.mxu0 %v956
    %1084 = vmatpush1.bf16.msra.mxu0 %v955
    %1085 = vmatprep.subr.bf16.mxu0 %v958
    %1086 = vmatpush1.bf16.msra.mxu0 %v957
    %1087 = vmatprep.subr.bf16.mxu0 %v960
    %1088 = vmatpush1.bf16.msra.mxu0 %v959
    %1089 = vmatprep.subr.bf16.mxu0 %v962
    %1090 = vmatpush1.bf16.msra.mxu0 %v961
    %1091 = vmatprep.subr.bf16.mxu0 %v964
    %1092 = vmatpush1.bf16.msra.mxu0 %v963
    %1093 = vmatprep.subr.bf16.mxu0 %v966
    %1094 = vmatpush1.bf16.msra.mxu0 %v965
    %1095 = vmatprep.subr.bf16.mxu0 %v968
    %1096 = vmatpush1.bf16.msra.mxu0 %v967
    %1097 = vmatprep.subr.bf16.mxu0 %v970
    %1098 = vmatpush1.bf16.msra.mxu0 %v969
    %1099 = vmatprep.subr.bf16.mxu0 %v972
    %1100 = vmatpush1.bf16.msra.mxu0 %v971
    %1101 = vmatprep.subr.bf16.mxu0 %v974
    %1102 = vmatpush1.bf16.msra.mxu0 %v973
    %1103 = vmatprep.subr.bf16.mxu0 %v976
    %1104 = vmatpush1.bf16.msra.mxu0 %v975
    %1105 = vmatprep.subr.bf16.mxu0 %v978
    %1106 = vmatpush1.bf16.msra.mxu0 %v977
    %1107 = vmatprep.subr.bf16.mxu0 %v980
    %1108 = vmatpush1.bf16.msra.mxu0 %v979
    %1109 = vmatprep.mubr.bf16.mxu0 %v743
    %1110 = vmatmul.mubr.bf16.gmra.mrb[0].mxu0 %v742
    %v1111 = vpop.f32.mrb[0].mxu0
    %v1112 = vadd.f32 %v750, %v1111
    %v1113 = vpop.f32.mrb[0].mxu0
    %v1114 = vadd.f32 %v754, %v1113
    %v1115 = vpop.f32.mrb[0].mxu0
    %v1116 = vadd.f32 %v750, %v1115
    %v1117 = vpop.f32.mrb[0].mxu0
    %v1118 = vadd.f32 %v754, %v1117
    %1119 = vdwg.mxu0
    %1120 = vmatprep.subr.bf16.mxu0 %v982
    %1121 = vmatpush1.bf16.msra.mxu0 %v981
    %1122 = vmatprep.subr.bf16.mxu0 %v984
    %1123 = vmatpush1.bf16.msra.mxu0 %v983
    %1124 = vmatprep.subr.bf16.mxu0 %v986
    %1125 = vmatpush1.bf16.msra.mxu0 %v985
    %1126 = vmatprep.subr.bf16.mxu0 %v988
    %1127 = vmatpush1.bf16.msra.mxu0 %v987
    %1128 = vmatprep.subr.bf16.mxu0 %v990
    %1129 = vmatpush1.bf16.msra.mxu0 %v989
    %1130 = vmatprep.subr.bf16.mxu0 %v992
    %1131 = vmatpush1.bf16.msra.mxu0 %v991
    %1132 = vmatprep.subr.bf16.mxu0 %v994
    %1133 = vmatpush1.bf16.msra.mxu0 %v993
    %1134 = vmatprep.subr.bf16.mxu0 %v996
    %1135 = vmatpush1.bf16.msra.mxu0 %v995
    %1136 = vmatprep.subr.bf16.mxu0 %v998
    %1137 = vmatpush1.bf16.msra.mxu0 %v997
    %1138 = vmatprep.subr.bf16.mxu0 %v1000
    %1139 = vmatpush1.bf16.msra.mxu0 %v999
    %1140 = vmatprep.subr.bf16.mxu0 %v1002
    %1141 = vmatpush1.bf16.msra.mxu0 %v1001
    %1142 = vmatprep.subr.bf16.mxu0 %v1004
    %1143 = vmatpush1.bf16.msra.mxu0 %v1003
    %1144 = vmatprep.subr.bf16.mxu0 %v1006
    %1145 = vmatpush1.bf16.msra.mxu0 %v1005
    %1146 = vmatprep.subr.bf16.mxu0 %v1008
    %1147 = vmatpush1.bf16.msra.mxu0 %v1007
    %1148 = vmatprep.subr.bf16.mxu0 %v1010
    %1149 = vmatpush1.bf16.msra.mxu0 %v1009
    %1150 = vmatprep.subr.bf16.mxu0 %v1012
    %1151 = vmatpush1.bf16.msra.mxu0 %v1011
    %1152 = vmatprep.mubr.bf16.mxu0 %v745
    %1153 = vmatmul.mubr.bf16.gmra.mrb[0].mxu0 %v744
    %v1154 = vpop.f32.mrb[0].mxu0
    %v1155 = vadd.f32 %v1112, %v1154
    %v1156 = vpop.f32.mrb[0].mxu0
    %v1157 = vadd.f32 %v1114, %v1156
    %v1158 = vpop.f32.mrb[0].mxu0
    %v1159 = vadd.f32 %v1116, %v1158
    %v1160 = vpop.f32.mrb[0].mxu0
    %v1161 = vadd.f32 %v1118, %v1160
    %1162 = vdwg.mxu0
    %v1163 = vld [vmem:[%s10] sm:$0x1]
    %v1164 = vld [vmem:[%s11] sm:$0x1]
    %v1165 = vadd.f32 %v1155, %v1159
    %v1166 = vrot.slane %v1165, 4
    %v1167 = vadd.f32 %v1165, %v1166
    %v1168 = vrot.slane %v1167, 2
    %v1169 = vadd.f32 %v1167, %v1168
    %v1170 = vrot.slane %v1169, 1
    %v1171 = vadd.f32 %v1169, %v1170
    %v1172 = vadd.f32 %v1157, %v1161
    %v1173 = vrot.slane %v1172, 4
    %v1174 = vadd.f32 %v1172, %v1173
    %v1175 = vrot.slane %v1174, 2
    %v1176 = vadd.f32 %v1174, %v1175
    %v1177 = vrot.slane %v1176, 1
    %v1178 = vadd.f32 %v1176, %v1177
    %v1179 = vadd.f32 %v1171, %v1178
    %v1180 = vmul.f32 %v1179, %v547
    %v1181 = vsub.f32 %v1155, %v1180
    %v1182 = vsub.f32 %v1159, %v1180
    %v1183 = vsub.f32 %v1157, %v1180
    %v1184 = vsub.f32 %v1161, %v1180
    %v1185 = vmul.f32 %v1181, %v1181
    %v1186 = vmul.f32 %v1182, %v1182
    %v1187 = vadd.f32 %v1185, %v1186
    %v1188 = vrot.slane %v1187, 4
    %v1189 = vadd.f32 %v1187, %v1188
    %v1190 = vrot.slane %v1189, 2
    %v1191 = vadd.f32 %v1189, %v1190
    %v1192 = vrot.slane %v1191, 1
    %v1193 = vadd.f32 %v1191, %v1192
    %v1194 = vmul.f32 %v1183, %v1183
    %v1195 = vmul.f32 %v1184, %v1184
    %v1196 = vadd.f32 %v1194, %v1195
    %v1197 = vrot.slane %v1196, 4
    %v1198 = vadd.f32 %v1196, %v1197
    %v1199 = vrot.slane %v1198, 2
    %v1200 = vadd.f32 %v1198, %v1199
    %v1201 = vrot.slane %v1200, 1
    %v1202 = vadd.f32 %v1200, %v1201
    %v1203 = vadd.f32 %v1193, %v1202
    %v1204 = vmul.f32 %v1203, %v547
    %v1205 = vadd.f32 %v1204, 1e-05
    %v1206 = vrsqrt.pop %v1205
    %v1207 = vmul.f32 %v1206, %v1163
    %v1208 = vlaneseq
    %v1209 = vshrl.u32 %v1208, 7
    %v1210 = vsub.s32 0, %v1209
    %v1211 = vrot.slane %v1207, %v1210
    %v1212 = vmul.f32 %v1181, %v1211
    %v1213 = vmul.f32 %v1182, %v1211
    %v1215 = vlaneseq
    %v1216 = vshrl.u32 %v1215, 7
    %v1217 = vsub.s32 0, %v1216
    %v1218 = vrot.slane %v1164, %v1217
    %v1220 = vadd.f32 %v1212, %v1218
    %v1221 = vadd.f32 %v1213, %v1218
    %v1222 = vmul.f32 %v1183, %v1211
    %v1223 = vmul.f32 %v1184, %v1211
    %v1224 = vadd.f32 %v1222, %v1218
    %v1225 = vadd.f32 %v1223, %v1218
    %vm1226 = vcmp.ge.f32.partialorder %v1220, 0.0
    %vm1227 = vcmp.ge.f32.partialorder %v1221, 0.0
    %v1228 = vmul.f32 %v1220, 0.2
    %v1229 = vmul.f32 %v1221, 0.2
    %v1230 = vsel %vm1226, %v1220, %v1228
    %v1231 = vsel %vm1227, %v1221, %v1229
    %vm1232 = vcmp.ge.f32.partialorder %v1224, 0.0
    %vm1233 = vcmp.ge.f32.partialorder %v1225, 0.0
    %v1234 = vmul.f32 %v1224, 0.2
    %v1235 = vmul.f32 %v1225, 0.2
    %v1236 = vsel %vm1232, %v1224, %v1234
    %v1237 = vsel %vm1233, %v1225, %v1235
    %v1238 = vld [vmem:[#allocation12] sm:$0xff]
    %v1239 = vld [vmem:[#allocation12 + $0x8] sm:$0xff]
    %v1240 = vld [vmem:[#allocation12 + $0x10] sm:$0xff]
    %v1241 = vld [vmem:[#allocation12 + $0x18] sm:$0xff]
    %v1242 = vld [vmem:[#allocation12 + $0x20] sm:$0xff]
    %v1243 = vld [vmem:[#allocation12 + $0x28] sm:$0xff]
    %v1244 = vld [vmem:[#allocation12 + $0x30] sm:$0xff]
    %v1245 = vld [vmem:[#allocation12 + $0x38] sm:$0xff]
    %v1246 = vld [vmem:[#allocation12 + $0x40] sm:$0xff]
    %v1247 = vld [vmem:[#allocation12 + $0x48] sm:$0xff]
    %v1248 = vld [vmem:[#allocation12 + $0x50] sm:$0xff]
    %v1249 = vld [vmem:[#allocation12 + $0x58] sm:$0xff]
    %v1250 = vld [vmem:[#allocation12 + $0x60] sm:$0xff]
    %v1251 = vld [vmem:[#allocation12 + $0x68] sm:$0xff]
    %v1252 = vld [vmem:[#allocation12 + $0x70] sm:$0xff]
    %v1253 = vld [vmem:[#allocation12 + $0x78] sm:$0xff]
    %v1254 = vld [vmem:[#allocation12 + $0x80] sm:$0xff]
    %v1255 = vld [vmem:[#allocation12 + $0x88] sm:$0xff]
    %v1256 = vld [vmem:[#allocation12 + $0x90] sm:$0xff]
    %v1257 = vld [vmem:[#allocation12 + $0x98] sm:$0xff]
    %v1258 = vld [vmem:[#allocation12 + $0xa0] sm:$0xff]
    %v1259 = vld [vmem:[#allocation12 + $0xa8] sm:$0xff]
    %v1260 = vld [vmem:[#allocation12 + $0xb0] sm:$0xff]
    %v1261 = vld [vmem:[#allocation12 + $0xb8] sm:$0xff]
    %v1262 = vld [vmem:[#allocation12 + $0xc0] sm:$0xff]
    %v1263 = vld [vmem:[#allocation12 + $0xc8] sm:$0xff]
    %v1264 = vld [vmem:[#allocation12 + $0xd0] sm:$0xff]
    %v1265 = vld [vmem:[#allocation12 + $0xd8] sm:$0xff]
    %v1266 = vld [vmem:[#allocation12 + $0xe0] sm:$0xff]
    %v1267 = vld [vmem:[#allocation12 + $0xe8] sm:$0xff]
    %v1268 = vld [vmem:[#allocation12 + $0xf0] sm:$0xff]
    %v1269 = vld [vmem:[#allocation12 + $0xf8] sm:$0xff]
    %v1270 = vld [vmem:[#allocation12 + $0x100] sm:$0xff]
    %v1271 = vld [vmem:[#allocation12 + $0x108] sm:$0xff]
    %v1272 = vld [vmem:[#allocation12 + $0x110] sm:$0xff]
    %v1273 = vld [vmem:[#allocation12 + $0x118] sm:$0xff]
    %v1274 = vld [vmem:[#allocation12 + $0x120] sm:$0xff]
    %v1275 = vld [vmem:[#allocation12 + $0x128] sm:$0xff]
    %v1276 = vld [vmem:[#allocation12 + $0x130] sm:$0xff]
    %v1277 = vld [vmem:[#allocation12 + $0x138] sm:$0xff]
    %v1278 = vld [vmem:[#allocation12 + $0x140] sm:$0xff]
    %v1279 = vld [vmem:[#allocation12 + $0x148] sm:$0xff]
    %v1280 = vld [vmem:[#allocation12 + $0x150] sm:$0xff]
    %v1281 = vld [vmem:[#allocation12 + $0x158] sm:$0xff]
    %v1282 = vld [vmem:[#allocation12 + $0x160] sm:$0xff]
    %v1283 = vld [vmem:[#allocation12 + $0x168] sm:$0xff]
    %v1284 = vld [vmem:[#allocation12 + $0x170] sm:$0xff]
    %v1285 = vld [vmem:[#allocation12 + $0x178] sm:$0xff]
    %v1286 = vld [vmem:[#allocation12 + $0x180] sm:$0xff]
    %v1287 = vld [vmem:[#allocation12 + $0x188] sm:$0xff]
    %v1288 = vld [vmem:[#allocation12 + $0x190] sm:$0xff]
    %v1289 = vld [vmem:[#allocation12 + $0x198] sm:$0xff]
    %v1290 = vld [vmem:[#allocation12 + $0x1a0] sm:$0xff]
    %v1291 = vld [vmem:[#allocation12 + $0x1a8] sm:$0xff]
    %v1292 = vld [vmem:[#allocation12 + $0x1b0] sm:$0xff]
    %v1293 = vld [vmem:[#allocation12 + $0x1b8] sm:$0xff]
    %v1294 = vld [vmem:[#allocation12 + $0x1c0] sm:$0xff]
    %v1295 = vld [vmem:[#allocation12 + $0x1c8] sm:$0xff]
    %v1296 = vld [vmem:[#allocation12 + $0x1d0] sm:$0xff]
    %v1297 = vld [vmem:[#allocation12 + $0x1d8] sm:$0xff]
    %v1298 = vld [vmem:[#allocation12 + $0x1e0] sm:$0xff]
    %v1299 = vld [vmem:[#allocation12 + $0x1e8] sm:$0xff]
    %v1300 = vld [vmem:[#allocation12 + $0x1f0] sm:$0xff]
    %v1301 = vld [vmem:[#allocation12 + $0x1f8] sm:$0xff]
    %v1302 = vld [vmem:[%s13] sm:$0x3]
    %1303 = vst [vmem:[#allocation4 + $0x1] sm:$0xff] %v1236
    %1304 = vst [vmem:[#allocation4 + $0x11] sm:$0xff] %v1237
    %1305 = vst [vmem:[#allocation3 + $0x1] sm:$0xff] %v1230
    %1306 = vst [vmem:[#allocation3 + $0x11] sm:$0xff] %v1231
    %v1307 = vld [vmem:[#allocation4] sm:$0xff]
    %v1308 = vld [vmem:[#allocation4 + $0x10] sm:$0xff]
    %v1309 = vld [vmem:[#allocation3 + $0x2] sm:$0xff]
    %v1310 = vld [vmem:[#allocation3 + $0x12] sm:$0xff]
    %v1311 = vpack.c.bf16 %v1308, %v1307
    %v1312 = vpack.c.bf16 %v1231, %v1230
    %v1313 = vpack.c.bf16 %v1237, %v1236
    %v1314 = vpack.c.bf16 %v1310, %v1309
    %v1316 = vlaneseq
    %v1317 = vshrl.u32 %v1316, 7
    %v1318 = vsub.s32 0, %v1317
    %v1319 = vrot.slane %v1302, %v1318
    %v1320 = vlaneseq
    %v1321 = vshrl.u32 %v1320, 7
    %v1322 = vsub.s32 1, %v1321
    %v1323 = vrot.slane %v1302, %v1322
    %v1390 = vunpack.c.l.b16 %v1238
    %v1391 = vunpack.c.h.b16 %v1238
    %v1392 = vunpack.c.l.b16 %v1239
    %v1393 = vunpack.c.h.b16 %v1239
    %v1394 = vunpack.c.l.b16 %v1240
    %v1395 = vunpack.c.h.b16 %v1240
    %v1396 = vunpack.c.l.b16 %v1241
    %v1397 = vunpack.c.h.b16 %v1241
    %v1398 = vunpack.c.l.b16 %v1242
    %v1399 = vunpack.c.h.b16 %v1242
    %v1400 = vunpack.c.l.b16 %v1243
    %v1401 = vunpack.c.h.b16 %v1243
    %v1402 = vunpack.c.l.b16 %v1244
    %v1403 = vunpack.c.h.b16 %v1244
    %v1404 = vunpack.c.l.b16 %v1245
    %v1405 = vunpack.c.h.b16 %v1245
    %v1406 = vunpack.c.l.b16 %v1246
    %v1407 = vunpack.c.h.b16 %v1246
    %v1408 = vunpack.c.l.b16 %v1247
    %v1409 = vunpack.c.h.b16 %v1247
    %v1410 = vunpack.c.l.b16 %v1248
    %v1411 = vunpack.c.h.b16 %v1248
    %v1412 = vunpack.c.l.b16 %v1249
    %v1413 = vunpack.c.h.b16 %v1249
    %v1414 = vunpack.c.l.b16 %v1250
    %v1415 = vunpack.c.h.b16 %v1250
    %v1416 = vunpack.c.l.b16 %v1251
    %v1417 = vunpack.c.h.b16 %v1251
    %v1418 = vunpack.c.l.b16 %v1252
    %v1419 = vunpack.c.h.b16 %v1252
    %v1420 = vunpack.c.l.b16 %v1253
    %v1421 = vunpack.c.h.b16 %v1253
    %v1422 = vunpack.c.l.b16 %v1254
    %v1423 = vunpack.c.h.b16 %v1254
    %v1424 = vunpack.c.l.b16 %v1255
    %v1425 = vunpack.c.h.b16 %v1255
    %v1426 = vunpack.c.l.b16 %v1256
    %v1427 = vunpack.c.h.b16 %v1256
    %v1428 = vunpack.c.l.b16 %v1257
    %v1429 = vunpack.c.h.b16 %v1257
    %v1430 = vunpack.c.l.b16 %v1258
    %v1431 = vunpack.c.h.b16 %v1258
    %v1432 = vunpack.c.l.b16 %v1259
    %v1433 = vunpack.c.h.b16 %v1259
    %v1434 = vunpack.c.l.b16 %v1260
    %v1435 = vunpack.c.h.b16 %v1260
    %v1436 = vunpack.c.l.b16 %v1261
    %v1437 = vunpack.c.h.b16 %v1261
    %v1438 = vunpack.c.l.b16 %v1262
    %v1439 = vunpack.c.h.b16 %v1262
    %v1440 = vunpack.c.l.b16 %v1263
    %v1441 = vunpack.c.h.b16 %v1263
    %v1442 = vunpack.c.l.b16 %v1264
    %v1443 = vunpack.c.h.b16 %v1264
    %v1444 = vunpack.c.l.b16 %v1265
    %v1445 = vunpack.c.h.b16 %v1265
    %v1446 = vunpack.c.l.b16 %v1266
    %v1447 = vunpack.c.h.b16 %v1266
    %v1448 = vunpack.c.l.b16 %v1267
    %v1449 = vunpack.c.h.b16 %v1267
    %v1450 = vunpack.c.l.b16 %v1268
    %v1451 = vunpack.c.h.b16 %v1268
    %v1452 = vunpack.c.l.b16 %v1269
    %v1453 = vunpack.c.h.b16 %v1269
    %v1454 = vunpack.c.l.b16 %v1270
    %v1455 = vunpack.c.h.b16 %v1270
    %v1456 = vunpack.c.l.b16 %v1271
    %v1457 = vunpack.c.h.b16 %v1271
    %v1458 = vunpack.c.l.b16 %v1272
    %v1459 = vunpack.c.h.b16 %v1272
    %v1460 = vunpack.c.l.b16 %v1273
    %v1461 = vunpack.c.h.b16 %v1273
    %v1462 = vunpack.c.l.b16 %v1274
    %v1463 = vunpack.c.h.b16 %v1274
    %v1464 = vunpack.c.l.b16 %v1275
    %v1465 = vunpack.c.h.b16 %v1275
    %v1466 = vunpack.c.l.b16 %v1276
    %v1467 = vunpack.c.h.b16 %v1276
    %v1468 = vunpack.c.l.b16 %v1277
    %v1469 = vunpack.c.h.b16 %v1277
    %v1470 = vunpack.c.l.b16 %v1278
    %v1471 = vunpack.c.h.b16 %v1278
    %v1472 = vunpack.c.l.b16 %v1279
    %v1473 = vunpack.c.h.b16 %v1279
    %v1474 = vunpack.c.l.b16 %v1280
    %v1475 = vunpack.c.h.b16 %v1280
    %v1476 = vunpack.c.l.b16 %v1281
    %v1477 = vunpack.c.h.b16 %v1281
    %v1478 = vunpack.c.l.b16 %v1282
    %v1479 = vunpack.c.h.b16 %v1282
    %v1480 = vunpack.c.l.b16 %v1283
    %v1481 = vunpack.c.h.b16 %v1283
    %v1482 = vunpack.c.l.b16 %v1284
    %v1483 = vunpack.c.h.b16 %v1284
    %v1484 = vunpack.c.l.b16 %v1285
    %v1485 = vunpack.c.h.b16 %v1285
    %v1486 = vunpack.c.l.b16 %v1286
    %v1487 = vunpack.c.h.b16 %v1286
    %v1488 = vunpack.c.l.b16 %v1287
    %v1489 = vunpack.c.h.b16 %v1287
    %v1490 = vunpack.c.l.b16 %v1288
    %v1491 = vunpack.c.h.b16 %v1288
    %v1492 = vunpack.c.l.b16 %v1289
    %v1493 = vunpack.c.h.b16 %v1289
    %v1494 = vunpack.c.l.b16 %v1290
    %v1495 = vunpack.c.h.b16 %v1290
    %v1496 = vunpack.c.l.b16 %v1291
    %v1497 = vunpack.c.h.b16 %v1291
    %v1498 = vunpack.c.l.b16 %v1292
    %v1499 = vunpack.c.h.b16 %v1292
    %v1500 = vunpack.c.l.b16 %v1293
    %v1501 = vunpack.c.h.b16 %v1293
    %v1502 = vunpack.c.l.b16 %v1294
    %v1503 = vunpack.c.h.b16 %v1294
    %v1504 = vunpack.c.l.b16 %v1295
    %v1505 = vunpack.c.h.b16 %v1295
    %v1506 = vunpack.c.l.b16 %v1296
    %v1507 = vunpack.c.h.b16 %v1296
    %v1508 = vunpack.c.l.b16 %v1297
    %v1509 = vunpack.c.h.b16 %v1297
    %v1510 = vunpack.c.l.b16 %v1298
    %v1511 = vunpack.c.h.b16 %v1298
    %v1512 = vunpack.c.l.b16 %v1299
    %v1513 = vunpack.c.h.b16 %v1299
    %v1514 = vunpack.c.l.b16 %v1300
    %v1515 = vunpack.c.h.b16 %v1300
    %v1516 = vunpack.c.l.b16 %v1301
    %v1517 = vunpack.c.h.b16 %v1301
    %v1518 = vpack.c.b16 %v1392, %v1390
    %v1519 = vpack.c.b16 %v1393, %v1391
    %v1520 = vpack.c.b16 %v1396, %v1394
    %v1521 = vpack.c.b16 %v1397, %v1395
    %v1522 = vpack.c.b16 %v1400, %v1398
    %v1523 = vpack.c.b16 %v1401, %v1399
    %v1524 = vpack.c.b16 %v1404, %v1402
    %v1525 = vpack.c.b16 %v1405, %v1403
    %v1526 = vpack.c.b16 %v1408, %v1406
    %v1527 = vpack.c.b16 %v1409, %v1407
    %v1528 = vpack.c.b16 %v1412, %v1410
    %v1529 = vpack.c.b16 %v1413, %v1411
    %v1530 = vpack.c.b16 %v1416, %v1414
    %v1531 = vpack.c.b16 %v1417, %v1415
    %v1532 = vpack.c.b16 %v1420, %v1418
    %v1533 = vpack.c.b16 %v1421, %v1419
    %v1534 = vpack.c.b16 %v1424, %v1422
    %v1535 = vpack.c.b16 %v1425, %v1423
    %v1536 = vpack.c.b16 %v1428, %v1426
    %v1537 = vpack.c.b16 %v1429, %v1427
    %v1538 = vpack.c.b16 %v1432, %v1430
    %v1539 = vpack.c.b16 %v1433, %v1431
    %v1540 = vpack.c.b16 %v1436, %v1434
    %v1541 = vpack.c.b16 %v1437, %v1435
    %v1542 = vpack.c.b16 %v1440, %v1438
    %v1543 = vpack.c.b16 %v1441, %v1439
    %v1544 = vpack.c.b16 %v1444, %v1442
    %v1545 = vpack.c.b16 %v1445, %v1443
    %v1546 = vpack.c.b16 %v1448, %v1446
    %v1547 = vpack.c.b16 %v1449, %v1447
    %v1548 = vpack.c.b16 %v1452, %v1450
    %v1549 = vpack.c.b16 %v1453, %v1451
    %v1550 = vpack.c.b16 %v1456, %v1454
    %v1551 = vpack.c.b16 %v1457, %v1455
    %v1552 = vpack.c.b16 %v1460, %v1458
    %v1553 = vpack.c.b16 %v1461, %v1459
    %v1554 = vpack.c.b16 %v1464, %v1462
    %v1555 = vpack.c.b16 %v1465, %v1463
    %v1556 = vpack.c.b16 %v1468, %v1466
    %v1557 = vpack.c.b16 %v1469, %v1467
    %v1558 = vpack.c.b16 %v1472, %v1470
    %v1559 = vpack.c.b16 %v1473, %v1471
    %v1560 = vpack.c.b16 %v1476, %v1474
    %v1561 = vpack.c.b16 %v1477, %v1475
    %v1562 = vpack.c.b16 %v1480, %v1478
    %v1563 = vpack.c.b16 %v1481, %v1479
    %v1564 = vpack.c.b16 %v1484, %v1482
    %v1565 = vpack.c.b16 %v1485, %v1483
    %v1566 = vpack.c.b16 %v1488, %v1486
    %v1567 = vpack.c.b16 %v1489, %v1487
    %v1568 = vpack.c.b16 %v1492, %v1490
    %v1569 = vpack.c.b16 %v1493, %v1491
    %v1570 = vpack.c.b16 %v1496, %v1494
    %v1571 = vpack.c.b16 %v1497, %v1495
    %v1572 = vpack.c.b16 %v1500, %v1498
    %v1573 = vpack.c.b16 %v1501, %v1499
    %v1574 = vpack.c.b16 %v1504, %v1502
    %v1575 = vpack.c.b16 %v1505, %v1503
    %v1576 = vpack.c.b16 %v1508, %v1506
    %v1577 = vpack.c.b16 %v1509, %v1507
    %v1578 = vpack.c.b16 %v1512, %v1510
    %v1579 = vpack.c.b16 %v1513, %v1511
    %v1580 = vpack.c.b16 %v1516, %v1514
    %v1581 = vpack.c.b16 %v1517, %v1515
    %1646 = vmatprep.subr.bf16.mxu0 %v1519
    %1647 = vmatpush1.bf16.msra.mxu0 %v1518
    %1648 = vmatprep.subr.bf16.mxu0 %v1521
    %1649 = vmatpush1.bf16.msra.mxu0 %v1520
    %1650 = vmatprep.subr.bf16.mxu0 %v1523
    %1651 = vmatpush1.bf16.msra.mxu0 %v1522
    %1652 = vmatprep.subr.bf16.mxu0 %v1525
    %1653 = vmatpush1.bf16.msra.mxu0 %v1524
    %1654 = vmatprep.subr.bf16.mxu0 %v1527
    %1655 = vmatpush1.bf16.msra.mxu0 %v1526
    %1656 = vmatprep.subr.bf16.mxu0 %v1529
    %1657 = vmatpush1.bf16.msra.mxu0 %v1528
    %1658 = vmatprep.subr.bf16.mxu0 %v1531
    %1659 = vmatpush1.bf16.msra.mxu0 %v1530
    %1660 = vmatprep.subr.bf16.mxu0 %v1533
    %1661 = vmatpush1.bf16.msra.mxu0 %v1532
    %1662 = vmatprep.subr.bf16.mxu0 %v1535
    %1663 = vmatpush1.bf16.msra.mxu0 %v1534
    %1664 = vmatprep.subr.bf16.mxu0 %v1537
    %1665 = vmatpush1.bf16.msra.mxu0 %v1536
    %1666 = vmatprep.subr.bf16.mxu0 %v1539
    %1667 = vmatpush1.bf16.msra.mxu0 %v1538
    %1668 = vmatprep.subr.bf16.mxu0 %v1541
    %1669 = vmatpush1.bf16.msra.mxu0 %v1540
    %1670 = vmatprep.subr.bf16.mxu0 %v1543
    %1671 = vmatpush1.bf16.msra.mxu0 %v1542
    %1672 = vmatprep.subr.bf16.mxu0 %v1545
    %1673 = vmatpush1.bf16.msra.mxu0 %v1544
    %1674 = vmatprep.subr.bf16.mxu0 %v1547
    %1675 = vmatpush1.bf16.msra.mxu0 %v1546
    %1676 = vmatprep.subr.bf16.mxu0 %v1549
    %1677 = vmatpush1.bf16.msra.mxu0 %v1548
    %1678 = vmatprep.mubr.bf16.mxu0 %v1312
    %1679 = vmatmul.mubr.bf16.gmra.mrb[0].mxu0 %v1311
    %v1680 = vpop.f32.mrb[0].mxu0
    %v1681 = vadd.f32 %v1319, %v1680
    %v1682 = vpop.f32.mrb[0].mxu0
    %v1683 = vadd.f32 %v1323, %v1682
    %v1684 = vpop.f32.mrb[0].mxu0
    %v1685 = vadd.f32 %v1319, %v1684
    %v1686 = vpop.f32.mrb[0].mxu0
    %v1687 = vadd.f32 %v1323, %v1686
    %1688 = vdwg.mxu0
    %1689 = vmatprep.subr.bf16.mxu0 %v1551
    %1690 = vmatpush1.bf16.msra.mxu0 %v1550
    %1691 = vmatprep.subr.bf16.mxu0 %v1553
    %1692 = vmatpush1.bf16.msra.mxu0 %v1552
    %1693 = vmatprep.subr.bf16.mxu0 %v1555
    %1694 = vmatpush1.bf16.msra.mxu0 %v1554
    %1695 = vmatprep.subr.bf16.mxu0 %v1557
    %1696 = vmatpush1.bf16.msra.mxu0 %v1556
    %1697 = vmatprep.subr.bf16.mxu0 %v1559
    %1698 = vmatpush1.bf16.msra.mxu0 %v1558
    %1699 = vmatprep.subr.bf16.mxu0 %v1561
    %1700 = vmatpush1.bf16.msra.mxu0 %v1560
    %1701 = vmatprep.subr.bf16.mxu0 %v1563
    %1702 = vmatpush1.bf16.msra.mxu0 %v1562
    %1703 = vmatprep.subr.bf16.mxu0 %v1565
    %1704 = vmatpush1.bf16.msra.mxu0 %v1564
    %1705 = vmatprep.subr.bf16.mxu0 %v1567
    %1706 = vmatpush1.bf16.msra.mxu0 %v1566
    %1707 = vmatprep.subr.bf16.mxu0 %v1569
    %1708 = vmatpush1.bf16.msra.mxu0 %v1568
    %1709 = vmatprep.subr.bf16.mxu0 %v1571
    %1710 = vmatpush1.bf16.msra.mxu0 %v1570
    %1711 = vmatprep.subr.bf16.mxu0 %v1573
    %1712 = vmatpush1.bf16.msra.mxu0 %v1572
    %1713 = vmatprep.subr.bf16.mxu0 %v1575
    %1714 = vmatpush1.bf16.msra.mxu0 %v1574
    %1715 = vmatprep.subr.bf16.mxu0 %v1577
    %1716 = vmatpush1.bf16.msra.mxu0 %v1576
    %1717 = vmatprep.subr.bf16.mxu0 %v1579
    %1718 = vmatpush1.bf16.msra.mxu0 %v1578
    %1719 = vmatprep.subr.bf16.mxu0 %v1581
    %1720 = vmatpush1.bf16.msra.mxu0 %v1580
    %1721 = vmatprep.mubr.bf16.mxu0 %v1314
    %1722 = vmatmul.mubr.bf16.gmra.mrb[0].mxu0 %v1313
    %v1723 = vpop.f32.mrb[0].mxu0
    %v1724 = vadd.f32 %v1681, %v1723
    %v1725 = vpop.f32.mrb[0].mxu0
    %v1726 = vadd.f32 %v1683, %v1725
    %v1727 = vpop.f32.mrb[0].mxu0
    %v1728 = vadd.f32 %v1685, %v1727
    %v1729 = vpop.f32.mrb[0].mxu0
    %v1730 = vadd.f32 %v1687, %v1729
    %1731 = vdwg.mxu0
    %v1732 = vadd.f32 %v1724, %v588
    %v1733 = vadd.f32 %v1728, %v589
    %v1734 = vadd.f32 %v1726, %v592
    %v1735 = vadd.f32 %v1730, %v593
    %1736 = vst [vmem:[#allocation5] sm:$0xff] %v1732
    %1737 = vst [vmem:[#allocation5 + $0x10] sm:$0xff] %v1733
    %1738 = vst [vmem:[#allocation5 + $0x8] sm:$0xff] %v1734
    %1739 = vst [vmem:[#allocation5 + $0x18] sm:$0xff] %v1735
    %v1740 = vld [vmem:[#allocation5] sm:$0xff]
    %v1741 = vld [vmem:[#allocation5 + $0x8] sm:$0xff]
    %v1742 = vld [vmem:[#allocation5 + $0x10] sm:$0xff]
    %v1743 = vld [vmem:[#allocation5 + $0x18] sm:$0xff]
    %v1744 = vpack.c.bf16 %v1741, %v1740
    %v1745 = vpack.c.bf16 %v1743, %v1742
    %v1746 = vld [vmem:[%s14] sm:$0xf]
    %v1747 = vld [vmem:[%s14 + $0x4] sm:$0xf]
    %v1748 = vld [vmem:[%s14 + $0x8] sm:$0xf]
    %v1749 = vld [vmem:[%s14 + $0xc] sm:$0xf]
    %v1750 = vld [vmem:[%s14 + $0x10] sm:$0xf]
    %v1751 = vld [vmem:[%s14 + $0x14] sm:$0xf]
    %v1752 = vld [vmem:[%s14 + $0x18] sm:$0xf]
    %v1753 = vld [vmem:[%s14 + $0x1c] sm:$0xf]
    %v1754 = vld [vmem:[%s14 + $0x20] sm:$0xf]
    %v1755 = vld [vmem:[%s14 + $0x24] sm:$0xf]
    %v1756 = vld [vmem:[%s14 + $0x28] sm:$0xf]
    %v1757 = vld [vmem:[%s14 + $0x2c] sm:$0xf]
    %v1758 = vld [vmem:[%s14 + $0x30] sm:$0xf]
    %v1759 = vld [vmem:[%s14 + $0x34] sm:$0xf]
    %v1760 = vld [vmem:[%s14 + $0x38] sm:$0xf]
    %v1761 = vld [vmem:[%s14 + $0x3c] sm:$0xf]
    %v1762 = vld [vmem:[%s15] sm:$0x1]
    %v1764 = vlaneseq
    %v1765 = vshrl.u32 %v1764, 7
    %v1766 = vsub.s32 0, %v1765
    %v1767 = vrot.slane %v1762, %v1766
    %v1785 = vunpack.c.l.b16 %v1746
    %v1786 = vunpack.c.l.b16 %v1747
    %v1787 = vunpack.c.l.b16 %v1748
    %v1788 = vunpack.c.l.b16 %v1749
    %v1789 = vunpack.c.l.b16 %v1750
    %v1790 = vunpack.c.l.b16 %v1751
    %v1791 = vunpack.c.l.b16 %v1752
    %v1792 = vunpack.c.l.b16 %v1753
    %v1793 = vunpack.c.l.b16 %v1754
    %v1794 = vunpack.c.l.b16 %v1755
    %v1795 = vunpack.c.l.b16 %v1756
    %v1796 = vunpack.c.l.b16 %v1757
    %v1797 = vunpack.c.l.b16 %v1758
    %v1798 = vunpack.c.l.b16 %v1759
    %v1799 = vunpack.c.l.b16 %v1760
    %v1800 = vunpack.c.l.b16 %v1761
    %v1801 = vpack.c.b16 %v1786, %v1785
    %v1802 = vpack.c.b16 %v1788, %v1787
    %v1803 = vpack.c.b16 %v1790, %v1789
    %v1804 = vpack.c.b16 %v1792, %v1791
    %v1805 = vpack.c.b16 %v1794, %v1793
    %v1806 = vpack.c.b16 %v1796, %v1795
    %v1807 = vpack.c.b16 %v1798, %v1797
    %v1808 = vpack.c.b16 %v1800, %v1799
    %1817 = vmatprep.subr.bf16.mxu0 0
    %1818 = vmatpush1.bf16.msra.mxu0 %v1801
    %1819 = vmatprep.subr.bf16.mxu0 0
    %1820 = vmatpush1.bf16.msra.mxu0 %v1802
    %1821 = vmatprep.subr.bf16.mxu0 0
    %1822 = vmatpush1.bf16.msra.mxu0 %v1803
    %1823 = vmatprep.subr.bf16.mxu0 0
    %1824 = vmatpush1.bf16.msra.mxu0 %v1804
    %1825 = vmatprep.subr.bf16.mxu0 0
    %1826 = vmatpush1.bf16.msra.mxu0 %v1805
    %1827 = vmatprep.subr.bf16.mxu0 0
    %1828 = vmatpush1.bf16.msra.mxu0 %v1806
    %1829 = vmatprep.subr.bf16.mxu0 0
    %1830 = vmatpush1.bf16.msra.mxu0 %v1807
    %1831 = vmatprep.subr.bf16.mxu0 0
    %1832 = vmatpush1.bf16.msra.mxu0 %v1808
    %1833 = vmatprep.subr.bf16.mxu0 0
    %1834 = vmatpush1.bf16.msra.mxu0 0
    %1835 = vmatprep.subr.bf16.mxu0 0
    %1836 = vmatpush1.bf16.msra.mxu0 0
    %1837 = vmatprep.subr.bf16.mxu0 0
    %1838 = vmatpush1.bf16.msra.mxu0 0
    %1839 = vmatprep.subr.bf16.mxu0 0
    %1840 = vmatpush1.bf16.msra.mxu0 0
    %1841 = vmatprep.subr.bf16.mxu0 0
    %1842 = vmatpush1.bf16.msra.mxu0 0
    %1843 = vmatprep.subr.bf16.mxu0 0
    %1844 = vmatpush1.bf16.msra.mxu0 0
    %1845 = vmatprep.subr.bf16.mxu0 0
    %1846 = vmatpush1.bf16.msra.mxu0 0
    %1847 = vmatprep.subr.bf16.mxu0 0
    %1848 = vmatpush1.bf16.msra.mxu0 0
    %1849 = vmatprep.mubr.bf16.mxu0 0
    %1850 = vmatmul.mubr.bf16.gmra.mrb[0].mxu0 %v1744
    %v1851 = vpop.f32.mrb[0].mxu0
    %v1852 = vadd.f32 %v1767, %v1851
    %v1853 = vpop.f32.mrb[0].mxu0
    %v1854 = vpop.f32.mrb[0].mxu0
    %v1855 = vadd.f32 %v1767, %v1854
    %v1856 = vpop.f32.mrb[0].mxu0
    %1857 = vmatprep.mubr.bf16.mxu0 0
    %1858 = vmatmul.mubr.bf16.gmra.mrb[0].mxu0 %v1745
    %v1859 = vpop.f32.mrb[0].mxu0
    %v1860 = vadd.f32 %v1767, %v1859
    %v1861 = vpop.f32.mrb[0].mxu0
    %v1862 = vpop.f32.mrb[0].mxu0
    %v1863 = vadd.f32 %v1767, %v1862
    %v1864 = vpop.f32.mrb[0].mxu0
    %1865 = vdwg.mxu0
    %v1866 = vld [vmem:[%s16] sm:$0xf]
    %v1867 = vld [vmem:[%s16 + $0x4] sm:$0xf]
    %v1868 = vld [vmem:[%s16 + $0x8] sm:$0xf]
    %v1869 = vld [vmem:[%s16 + $0xc] sm:$0xf]
    %v1870 = vld [vmem:[%s16 + $0x10] sm:$0xf]
    %v1871 = vld [vmem:[%s16 + $0x14] sm:$0xf]
    %v1872 = vld [vmem:[%s16 + $0x18] sm:$0xf]
    %v1873 = vld [vmem:[%s16 + $0x1c] sm:$0xf]
    %v1874 = vld [vmem:[%s16 + $0x20] sm:$0xf]
    %v1875 = vld [vmem:[%s16 + $0x24] sm:$0xf]
    %v1876 = vld [vmem:[%s16 + $0x28] sm:$0xf]
    %v1877 = vld [vmem:[%s16 + $0x2c] sm:$0xf]
    %v1878 = vld [vmem:[%s16 + $0x30] sm:$0xf]
    %v1879 = vld [vmem:[%s16 + $0x34] sm:$0xf]
    %v1880 = vld [vmem:[%s16 + $0x38] sm:$0xf]
    %v1881 = vld [vmem:[%s16 + $0x3c] sm:$0xf]
    %v1882 = vld [vmem:[%s17] sm:$0x1]
    %v1884 = vlaneseq
    %v1885 = vshrl.u32 %v1884, 7
    %v1886 = vsub.s32 0, %v1885
    %v1887 = vrot.slane %v1882, %v1886
    %v1905 = vunpack.c.l.b16 %v1866
    %v1906 = vunpack.c.l.b16 %v1867
    %v1907 = vunpack.c.l.b16 %v1868
    %v1908 = vunpack.c.l.b16 %v1869
    %v1909 = vunpack.c.l.b16 %v1870
    %v1910 = vunpack.c.l.b16 %v1871
    %v1911 = vunpack.c.l.b16 %v1872
    %v1912 = vunpack.c.l.b16 %v1873
    %v1913 = vunpack.c.l.b16 %v1874
    %v1914 = vunpack.c.l.b16 %v1875
    %v1915 = vunpack.c.l.b16 %v1876
    %v1916 = vunpack.c.l.b16 %v1877
    %v1917 = vunpack.c.l.b16 %v1878
    %v1918 = vunpack.c.l.b16 %v1879
    %v1919 = vunpack.c.l.b16 %v1880
    %v1920 = vunpack.c.l.b16 %v1881
    %v1921 = vpack.c.b16 %v1906, %v1905
    %v1922 = vpack.c.b16 %v1908, %v1907
    %v1923 = vpack.c.b16 %v1910, %v1909
    %v1924 = vpack.c.b16 %v1912, %v1911
    %v1925 = vpack.c.b16 %v1914, %v1913
    %v1926 = vpack.c.b16 %v1916, %v1915
    %v1927 = vpack.c.b16 %v1918, %v1917
    %v1928 = vpack.c.b16 %v1920, %v1919
    %1937 = vmatprep.subr.bf16.mxu0 0
    %1938 = vmatpush1.bf16.msra.mxu0 %v1921
    %1939 = vmatprep.subr.bf16.mxu0 0
    %1940 = vmatpush1.bf16.msra.mxu0 %v1922
    %1941 = vmatprep.subr.bf16.mxu0 0
    %1942 = vmatpush1.bf16.msra.mxu0 %v1923
    %1943 = vmatprep.subr.bf16.mxu0 0
    %1944 = vmatpush1.bf16.msra.mxu0 %v1924
    %1945 = vmatprep.subr.bf16.mxu0 0
    %1946 = vmatpush1.bf16.msra.mxu0 %v1925
    %1947 = vmatprep.subr.bf16.mxu0 0
    %1948 = vmatpush1.bf16.msra.mxu0 %v1926
    %1949 = vmatprep.subr.bf16.mxu0 0
    %1950 = vmatpush1.bf16.msra.mxu0 %v1927
    %1951 = vmatprep.subr.bf16.mxu0 0
    %1952 = vmatpush1.bf16.msra.mxu0 %v1928
    %1953 = vmatprep.subr.bf16.mxu0 0
    %1954 = vmatpush1.bf16.msra.mxu0 0
    %1955 = vmatprep.subr.bf16.mxu0 0
    %1956 = vmatpush1.bf16.msra.mxu0 0
    %1957 = vmatprep.subr.bf16.mxu0 0
    %1958 = vmatpush1.bf16.msra.mxu0 0
    %1959 = vmatprep.subr.bf16.mxu0 0
    %1960 = vmatpush1.bf16.msra.mxu0 0
    %1961 = vmatprep.subr.bf16.mxu0 0
    %1962 = vmatpush1.bf16.msra.mxu0 0
    %1963 = vmatprep.subr.bf16.mxu0 0
    %1964 = vmatpush1.bf16.msra.mxu0 0
    %1965 = vmatprep.subr.bf16.mxu0 0
    %1966 = vmatpush1.bf16.msra.mxu0 0
    %1967 = vmatprep.subr.bf16.mxu0 0
    %1968 = vmatpush1.bf16.msra.mxu0 0
    %1969 = vmatprep.mubr.bf16.mxu0 0
    %1970 = vmatmul.mubr.bf16.gmra.mrb[0].mxu0 %v1744
    %v1971 = vpop.f32.mrb[0].mxu0
    %v1972 = vadd.f32 %v1887, %v1971
    %v1973 = vpop.f32.mrb[0].mxu0
    %v1974 = vpop.f32.mrb[0].mxu0
    %v1975 = vadd.f32 %v1887, %v1974
    %v1976 = vpop.f32.mrb[0].mxu0
    %1977 = vmatprep.mubr.bf16.mxu0 0
    %1978 = vmatmul.mubr.bf16.gmra.mrb[0].mxu0 %v1745
    %v1979 = vpop.f32.mrb[0].mxu0
    %v1980 = vadd.f32 %v1887, %v1979
    %v1981 = vpop.f32.mrb[0].mxu0
    %v1982 = vpop.f32.mrb[0].mxu0
    %v1983 = vadd.f32 %v1887, %v1982
    %v1984 = vpop.f32.mrb[0].mxu0
    %1985 = vdwg.mxu0
    %v1986 = vld [vmem:[%s18] sm:$0xf]
    %v1987 = vld [vmem:[%s18 + $0x4] sm:$0xf]
    %v1988 = vld [vmem:[%s18 + $0x8] sm:$0xf]
    %v1989 = vld [vmem:[%s18 + $0xc] sm:$0xf]
    %v1990 = vld [vmem:[%s18 + $0x10] sm:$0xf]
    %v1991 = vld [vmem:[%s18 + $0x14] sm:$0xf]
    %v1992 = vld [vmem:[%s18 + $0x18] sm:$0xf]
    %v1993 = vld [vmem:[%s18 + $0x1c] sm:$0xf]
    %v1994 = vld [vmem:[%s18 + $0x20] sm:$0xf]
    %v1995 = vld [vmem:[%s18 + $0x24] sm:$0xf]
    %v1996 = vld [vmem:[%s18 + $0x28] sm:$0xf]
    %v1997 = vld [vmem:[%s18 + $0x2c] sm:$0xf]
    %v1998 = vld [vmem:[%s18 + $0x30] sm:$0xf]
    %v1999 = vld [vmem:[%s18 + $0x34] sm:$0xf]
    %v2000 = vld [vmem:[%s18 + $0x38] sm:$0xf]
    %v2001 = vld [vmem:[%s18 + $0x3c] sm:$0xf]
    %v2002 = vld [vmem:[%s19] sm:$0x1]
    %v2004 = vlaneseq
    %v2005 = vshrl.u32 %v2004, 7
    %v2006 = vsub.s32 0, %v2005
    %v2007 = vrot.slane %v2002, %v2006
    %v2025 = vunpack.c.l.b16 %v1986
    %v2026 = vunpack.c.l.b16 %v1987
    %v2027 = vunpack.c.l.b16 %v1988
    %v2028 = vunpack.c.l.b16 %v1989
    %v2029 = vunpack.c.l.b16 %v1990
    %v2030 = vunpack.c.l.b16 %v1991
    %v2031 = vunpack.c.l.b16 %v1992
    %v2032 = vunpack.c.l.b16 %v1993
    %v2033 = vunpack.c.l.b16 %v1994
    %v2034 = vunpack.c.l.b16 %v1995
    %v2035 = vunpack.c.l.b16 %v1996
    %v2036 = vunpack.c.l.b16 %v1997
    %v2037 = vunpack.c.l.b16 %v1998
    %v2038 = vunpack.c.l.b16 %v1999
    %v2039 = vunpack.c.l.b16 %v2000
    %v2040 = vunpack.c.l.b16 %v2001
    %v2041 = vpack.c.b16 %v2026, %v2025
    %v2042 = vpack.c.b16 %v2028, %v2027
    %v2043 = vpack.c.b16 %v2030, %v2029
    %v2044 = vpack.c.b16 %v2032, %v2031
    %v2045 = vpack.c.b16 %v2034, %v2033
    %v2046 = vpack.c.b16 %v2036, %v2035
    %v2047 = vpack.c.b16 %v2038, %v2037
    %v2048 = vpack.c.b16 %v2040, %v2039
    %2057 = vmatprep.subr.bf16.mxu0 0
    %2058 = vmatpush1.bf16.msra.mxu0 %v2041
    %2059 = vmatprep.subr.bf16.mxu0 0
    %2060 = vmatpush1.bf16.msra.mxu0 %v2042
    %2061 = vmatprep.subr.bf16.mxu0 0
    %2062 = vmatpush1.bf16.msra.mxu0 %v2043
    %2063 = vmatprep.subr.bf16.mxu0 0
    %2064 = vmatpush1.bf16.msra.mxu0 %v2044
    %2065 = vmatprep.subr.bf16.mxu0 0
    %2066 = vmatpush1.bf16.msra.mxu0 %v2045
    %2067 = vmatprep.subr.bf16.mxu0 0
    %2068 = vmatpush1.bf16.msra.mxu0 %v2046
    %2069 = vmatprep.subr.bf16.mxu0 0
    %2070 = vmatpush1.bf16.msra.mxu0 %v2047
    %2071 = vmatprep.subr.bf16.mxu0 0
    %2072 = vmatpush1.bf16.msra.mxu0 %v2048
    %2073 = vmatprep.subr.bf16.mxu0 0
    %2074 = vmatpush1.bf16.msra.mxu0 0
    %2075 = vmatprep.subr.bf16.mxu0 0
    %2076 = vmatpush1.bf16.msra.mxu0 0
    %2077 = vmatprep.subr.bf16.mxu0 0
    %2078 = vmatpush1.bf16.msra.mxu0 0
    %2079 = vmatprep.subr.bf16.mxu0 0
    %2080 = vmatpush1.bf16.msra.mxu0 0
    %2081 = vmatprep.subr.bf16.mxu0 0
    %2082 = vmatpush1.bf16.msra.mxu0 0
    %2083 = vmatprep.subr.bf16.mxu0 0
    %2084 = vmatpush1.bf16.msra.mxu0 0
    %2085 = vmatprep.subr.bf16.mxu0 0
    %2086 = vmatpush1.bf16.msra.mxu0 0
    %2087 = vmatprep.subr.bf16.mxu0 0
    %2088 = vmatpush1.bf16.msra.mxu0 0
    %2089 = vmatprep.mubr.bf16.mxu0 0
    %2090 = vmatmul.mubr.bf16.gmra.mrb[0].mxu0 %v1744
    %v2091 = vpop.f32.mrb[0].mxu0
    %v2092 = vadd.f32 %v2007, %v2091
    %v2093 = vpop.f32.mrb[0].mxu0
    %v2094 = vpop.f32.mrb[0].mxu0
    %v2095 = vadd.f32 %v2007, %v2094
    %v2096 = vpop.f32.mrb[0].mxu0
    %2097 = vmatprep.mubr.bf16.mxu0 0
    %2098 = vmatmul.mubr.bf16.gmra.mrb[0].mxu0 %v1745
    %v2099 = vpop.f32.mrb[0].mxu0
    %v2100 = vadd.f32 %v2007, %v2099
    %v2101 = vpop.f32.mrb[0].mxu0
    %v2102 = vpop.f32.mrb[0].mxu0
    %v2103 = vadd.f32 %v2007, %v2102
    %v2104 = vpop.f32.mrb[0].mxu0
    %2105 = vdwg.mxu0
    %v2106 = vpack.c.bf16 %v1855, %v1852
    %v2107 = vpack.c.bf16 %v1863, %v1860
    %v2108 = vpack.c.bf16 %v1975, %v1972
    %v2109 = vpack.c.bf16 %v1983, %v1980
    %v2110 = vpack.c.bf16 %v2095, %v2092
    %v2111 = vpack.c.bf16 %v2103, %v2100
    %vm2112 = vcmask 130048
    %v2114 = vsel %vm2112, %v2106, 0
    %v2117 = vsel %vm2112, %v2108, 0
    %2119 = vmatprep.subr.bf16.mxu0 0
    %2120 = vmatpush1.bf16.xpose.msra.mxu0 %v2117
    %2121 = vmatprep.subr.bf16.mxu0 0
    %2122 = vmatpush1.bf16.xpose.msra.mxu0 0
    %2123 = vmatprep.subr.bf16.mxu0 0
    %2124 = vmatpush1.bf16.xpose.msra.mxu0 0
    %2125 = vmatprep.subr.bf16.mxu0 0
    %2126 = vmatpush1.bf16.xpose.msra.mxu0 0
    %2127 = vmatprep.subr.bf16.mxu0 0
    %2128 = vmatpush1.bf16.xpose.msra.mxu0 0
    %2129 = vmatprep.subr.bf16.mxu0 0
    %2130 = vmatpush1.bf16.xpose.msra.mxu0 0
    %2131 = vmatprep.subr.bf16.mxu0 0
    %2132 = vmatpush1.bf16.xpose.msra.mxu0 0
    %2133 = vmatprep.subr.bf16.mxu0 0
    %2134 = vmatpush1.bf16.xpose.msra.mxu0 0
    %2135 = vmatprep.subr.bf16.mxu0 0
    %2136 = vmatpush1.bf16.xpose.msra.mxu0 0
    %2137 = vmatprep.subr.bf16.mxu0 0
    %2138 = vmatpush1.bf16.xpose.msra.mxu0 0
    %2139 = vmatprep.subr.bf16.mxu0 0
    %2140 = vmatpush1.bf16.xpose.msra.mxu0 0
    %2141 = vmatprep.subr.bf16.mxu0 0
    %2142 = vmatpush1.bf16.xpose.msra.mxu0 0
    %2143 = vmatprep.subr.bf16.mxu0 0
    %2144 = vmatpush1.bf16.xpose.msra.mxu0 0
    %2145 = vmatprep.subr.bf16.mxu0 0
    %2146 = vmatpush1.bf16.xpose.msra.mxu0 0
    %2147 = vmatprep.subr.bf16.mxu0 0
    %2148 = vmatpush1.bf16.xpose.msra.mxu0 0
    %2149 = vmatprep.subr.bf16.mxu0 0
    %2150 = vmatpush1.bf16.xpose.msra.mxu0 0
    %2151 = vmatprep.mubr.bf16.mxu0 0
    %2152 = vmatmul.mubr.bf16.gmra.mrb[0].mxu0 %v2114
    %v2153 = vpop.f32.mrb[0].mxu0
    %v2154 = vadd.f32 0.0, %v2153
    %v2155 = vpop.f32.mrb[0].mxu0
    %v2156 = vpop.f32.mrb[0].mxu0
    %v2157 = vadd.f32 0.0, %v2156
    %v2158 = vpop.f32.mrb[0].mxu0
    %2159 = vdwg.mxu0
    %v2161 = vsel %vm2112, %v2107, 0
    %v2164 = vsel %vm2112, %v2109, 0
    %2166 = vmatprep.subr.bf16.mxu0 0
    %2167 = vmatpush1.bf16.xpose.msra.mxu0 %v2164
    %2168 = vmatprep.subr.bf16.mxu0 0
    %2169 = vmatpush1.bf16.xpose.msra.mxu0 0
    %2170 = vmatprep.subr.bf16.mxu0 0
    %2171 = vmatpush1.bf16.xpose.msra.mxu0 0
    %2172 = vmatprep.subr.bf16.mxu0 0
    %2173 = vmatpush1.bf16.xpose.msra.mxu0 0
    %2174 = vmatprep.subr.bf16.mxu0 0
    %2175 = vmatpush1.bf16.xpose.msra.mxu0 0
    %2176 = vmatprep.subr.bf16.mxu0 0
    %2177 = vmatpush1.bf16.xpose.msra.mxu0 0
    %2178 = vmatprep.subr.bf16.mxu0 0
    %2179 = vmatpush1.bf16.xpose.msra.mxu0 0
    %2180 = vmatprep.subr.bf16.mxu0 0
    %2181 = vmatpush1.bf16.xpose.msra.mxu0 0
    %2182 = vmatprep.subr.bf16.mxu0 0
    %2183 = vmatpush1.bf16.xpose.msra.mxu0 0
    %2184 = vmatprep.subr.bf16.mxu0 0
    %2185 = vmatpush1.bf16.xpose.msra.mxu0 0
    %2186 = vmatprep.subr.bf16.mxu0 0
    %2187 = vmatpush1.bf16.xpose.msra.mxu0 0
    %2188 = vmatprep.subr.bf16.mxu0 0
    %2189 = vmatpush1.bf16.xpose.msra.mxu0 0
    %2190 = vmatprep.subr.bf16.mxu0 0
    %2191 = vmatpush1.bf16.xpose.msra.mxu0 0
    %2192 = vmatprep.subr.bf16.mxu0 0
    %2193 = vmatpush1.bf16.xpose.msra.mxu0 0
    %2194 = vmatprep.subr.bf16.mxu0 0
    %2195 = vmatpush1.bf16.xpose.msra.mxu0 0
    %2196 = vmatprep.subr.bf16.mxu0 0
    %2197 = vmatpush1.bf16.xpose.msra.mxu0 0
    %2198 = vmatprep.mubr.bf16.mxu0 0
    %2199 = vmatmul.mubr.bf16.gmra.mrb[0].mxu0 %v2161
    %v2200 = vpop.f32.mrb[0].mxu0
    %v2201 = vadd.f32 0.0, %v2200
    %v2202 = vpop.f32.mrb[0].mxu0
    %v2203 = vpop.f32.mrb[0].mxu0
    %v2204 = vadd.f32 0.0, %v2203
    %v2205 = vpop.f32.mrb[0].mxu0
    %2206 = vdwg.mxu0
    %v2207 = vsel %vm2112, %v2154, -inf
    %2208 = vmax.xlane.f32.xlu0 %v2207
    %v2209 = vpop.xlane.xlu0 %2208
    %v2210 = vsel %vm2112, %v2157, -inf
    %2211 = vmax.xlane.f32.xlu0 %v2210
    %v2212 = vpop.xlane.xlu0 %2211
    %v2213 = vsel %vm2112, %v2201, -inf
    %2214 = vmax.xlane.f32.xlu0 %v2213
    %v2215 = vpop.xlane.xlu0 %2214
    %v2216 = vsel %vm2112, %v2204, -inf
    %2217 = vmax.xlane.f32.xlu0 %v2216
    %v2218 = vpop.xlane.xlu0 %2217
    %v2219 = vsub.f32 %v2154, %v2209
    %v2220 = vsub.f32 %v2157, %v2212
    %v2221 = vsub.f32 %v2201, %v2215
    %v2222 = vsub.f32 %v2204, %v2218
    %v2223 = vmul.f32 %v2219, 1.442695
    %v2224 = vpow.pop %v2223
    %v2225 = vmul.f32 %v2220, 1.442695
    %v2226 = vpow.pop %v2225
    %v2227 = vmul.f32 %v2221, 1.442695
    %v2228 = vpow.pop %v2227
    %v2229 = vmul.f32 %v2222, 1.442695
    %v2230 = vpow.pop %v2229
    %v2231 = vsel %vm2112, %v2224, 0.0
    %2232 = vadd.xlane.f32.xlu0 %v2231
    %v2233 = vpop.xlane.xlu0 %2232
    %v2234 = vsel %vm2112, %v2226, 0.0
    %2235 = vadd.xlane.f32.xlu0 %v2234
    %v2236 = vpop.xlane.xlu0 %2235
    %v2237 = vsel %vm2112, %v2228, 0.0
    %2238 = vadd.xlane.f32.xlu0 %v2237
    %v2239 = vpop.xlane.xlu0 %2238
    %v2240 = vsel %vm2112, %v2230, 0.0
    %2241 = vadd.xlane.f32.xlu0 %v2240
    %v2242 = vpop.xlane.xlu0 %2241
    %v2243 = vrcp.pop %v2233
    %v2244 = vrcp.pop %v2236
    %v2245 = vrcp.pop %v2239
    %v2246 = vrcp.pop %v2242
    %v2247 = vmul.f32 %v2224, %v2243
    %v2248 = vmul.f32 %v2226, %v2244
    %v2249 = vmul.f32 %v2228, %v2245
    %v2250 = vmul.f32 %v2230, %v2246
    %v2251 = vpack.c.bf16 %v2248, %v2247
    %v2252 = vpack.c.bf16 %v2250, %v2249
    %v2254 = vsel %vm2112, %v2251, 0
    %2256 = vmatprep.subr.bf16.mxu0 0
    %2257 = vmatpush1.bf16.msra.mxu0 %v2110
    %2258 = vmatprep.subr.bf16.mxu0 0
    %2259 = vmatpush1.bf16.msra.mxu0 0
    %2260 = vmatprep.subr.bf16.mxu0 0
    %2261 = vmatpush1.bf16.msra.mxu0 0
    %2262 = vmatprep.subr.bf16.mxu0 0
    %2263 = vmatpush1.bf16.msra.mxu0 0
    %2264 = vmatprep.subr.bf16.mxu0 0
    %2265 = vmatpush1.bf16.msra.mxu0 0
    %2266 = vmatprep.subr.bf16.mxu0 0
    %2267 = vmatpush1.bf16.msra.mxu0 0
    %2268 = vmatprep.subr.bf16.mxu0 0
    %2269 = vmatpush1.bf16.msra.mxu0 0
    %2270 = vmatprep.subr.bf16.mxu0 0
    %2271 = vmatpush1.bf16.msra.mxu0 0
    %2272 = vmatprep.subr.bf16.mxu0 0
    %2273 = vmatpush1.bf16.msra.mxu0 0
    %2274 = vmatprep.subr.bf16.mxu0 0
    %2275 = vmatpush1.bf16.msra.mxu0 0
    %2276 = vmatprep.subr.bf16.mxu0 0
    %2277 = vmatpush1.bf16.msra.mxu0 0
    %2278 = vmatprep.subr.bf16.mxu0 0
    %2279 = vmatpush1.bf16.msra.mxu0 0
    %2280 = vmatprep.subr.bf16.mxu0 0
    %2281 = vmatpush1.bf16.msra.mxu0 0
    %2282 = vmatprep.subr.bf16.mxu0 0
    %2283 = vmatpush1.bf16.msra.mxu0 0
    %2284 = vmatprep.subr.bf16.mxu0 0
    %2285 = vmatpush1.bf16.msra.mxu0 0
    %2286 = vmatprep.subr.bf16.mxu0 0
    %2287 = vmatpush1.bf16.msra.mxu0 0
    %2288 = vmatprep.mubr.bf16.mxu0 0
    %2289 = vmatmul.mubr.bf16.gmra.mrb[0].mxu0 %v2254
    %v2290 = vpop.f32.mrb[0].mxu0
    %v2291 = vadd.f32 0.0, %v2290
    %v2292 = vpop.f32.mrb[0].mxu0
    %v2293 = vpop.f32.mrb[0].mxu0
    %v2294 = vadd.f32 0.0, %v2293
    %v2295 = vpop.f32.mrb[0].mxu0
    %2296 = vdwg.mxu0
    %v2298 = vsel %vm2112, %v2252, 0
    %2300 = vmatprep.subr.bf16.mxu0 0
    %2301 = vmatpush1.bf16.msra.mxu0 %v2111
    %2302 = vmatprep.subr.bf16.mxu0 0
    %2303 = vmatpush1.bf16.msra.mxu0 0
    %2304 = vmatprep.subr.bf16.mxu0 0
    %2305 = vmatpush1.bf16.msra.mxu0 0
    %2306 = vmatprep.subr.bf16.mxu0 0
    %2307 = vmatpush1.bf16.msra.mxu0 0
    %2308 = vmatprep.subr.bf16.mxu0 0
    %2309 = vmatpush1.bf16.msra.mxu0 0
    %2310 = vmatprep.subr.bf16.mxu0 0
    %2311 = vmatpush1.bf16.msra.mxu0 0
    %2312 = vmatprep.subr.bf16.mxu0 0
    %2313 = vmatpush1.bf16.msra.mxu0 0
    %2314 = vmatprep.subr.bf16.mxu0 0
    %2315 = vmatpush1.bf16.msra.mxu0 0
    %2316 = vmatprep.subr.bf16.mxu0 0
    %2317 = vmatpush1.bf16.msra.mxu0 0
    %2318 = vmatprep.subr.bf16.mxu0 0
    %2319 = vmatpush1.bf16.msra.mxu0 0
    %2320 = vmatprep.subr.bf16.mxu0 0
    %2321 = vmatpush1.bf16.msra.mxu0 0
    %2322 = vmatprep.subr.bf16.mxu0 0
    %2323 = vmatpush1.bf16.msra.mxu0 0
    %2324 = vmatprep.subr.bf16.mxu0 0
    %2325 = vmatpush1.bf16.msra.mxu0 0
    %2326 = vmatprep.subr.bf16.mxu0 0
    %2327 = vmatpush1.bf16.msra.mxu0 0
    %2328 = vmatprep.subr.bf16.mxu0 0
    %2329 = vmatpush1.bf16.msra.mxu0 0
    %2330 = vmatprep.subr.bf16.mxu0 0
    %2331 = vmatpush1.bf16.msra.mxu0 0
    %2332 = vmatprep.mubr.bf16.mxu0 0
    %2333 = vmatmul.mubr.bf16.gmra.mrb[0].mxu0 %v2298
    %v2334 = vpop.f32.mrb[0].mxu0
    %v2335 = vadd.f32 0.0, %v2334
    %v2336 = vpop.f32.mrb[0].mxu0
    %v2337 = vpop.f32.mrb[0].mxu0
    %v2338 = vadd.f32 0.0, %v2337
    %v2339 = vpop.f32.mrb[0].mxu0
    %2340 = vdwg.mxu0
    %s2341 = sld [smem:[#allocation6]]
    %v2342 = vstv %s2341
    %v2343 = vmul.f32 %v2342, %v2291
    %v2344 = vmul.f32 %v2342, %v2294
    %v2345 = vmul.f32 %v2342, %v2335
    %v2346 = vmul.f32 %v2342, %v2338
    %v2347 = vadd.f32 %v2343, %v1740
    %v2348 = vadd.f32 %v2344, %v1741
    %v2349 = vadd.f32 %v2345, %v1742
    %v2350 = vadd.f32 %v2346, %v1743
    %2351 = vst [vmem:[#allocation13] sm:$0xff] %v2347
    %2352 = vst [vmem:[#allocation13 + $0x10] sm:$0xff] %v2349
    %2353 = vst [vmem:[#allocation13 + $0x8] sm:$0xff] %v2348
    %2354 = vst [vmem:[#allocation13 + $0x18] sm:$0xff] %v2350
    // Predicated region
    $region94: #{tpu_custom_call.1} parent=1 // pred_check
      _
    $region95: #{tpu_custom_call.1} parent=1 // pred_check_branch
      %2356 = sbr.rel (0) target = $region97
    $region96: #{tpu_custom_call.1} parent=1 // pred_region
      %s2358 = ssub.s32 512, 512
      %2359 = vsyncadd [#allocation9], %s2358
      %s2360 = sshll.u32 [#allocation13], 4
      %s2361 = int_to_ptr.vmem [resolvable:$true] %s2360
      %2366 = dma.vmem_to_hbm [thread:$0]  %s2361, 512, %s20, [#allocation9], 256, 256, 16
    $region97: #{tpu_custom_call.1} parent=1 // pred_fallthru
      _
    // Predicated region
    $region98: #{tpu_custom_call.1} parent=1 // pred_check
      _
    $region99: #{tpu_custom_call.1} parent=1 // pred_check_branch
      %2368 = sbr.rel (0) target = $region101
    $region100: #{tpu_custom_call.1} parent=1 // pred_region
      %2369 = dma.done [#allocation9], 512
    $region101: #{tpu_custom_call.1} parent=1 // pred_fallthru
      _
    %2370 = vsyncpa [#allocation8], 1
    %2371 = vsyncpa [#allocation11], 1
    %2372 = vsyncpa [#allocation9], 1

</llo_original>
